<compile_context>
chip_gen: v7x
topology: tpu7x:2x2x1
jax: 0.10.0
libtpu: 0.0.40
codegen_flags: <defaults>
</compile_context>

<pallas_src>
import jax
import jax.numpy as jnp
from jax.experimental import pallas as pl
from jax.experimental.pallas import tpu as pltpu

K = 7          # conv kernel size (7x7)
PAD = K // 2   # "same" padding = 3


def spatial_attention_kernel(w_ref, x_ref, o_ref, feat_ref):
    """Fused SpatialAttention for one batch element.

    w_ref:    SMEM (2*K*K,) f32   conv1 weight flattened in (c, kh, kw) order
    x_ref:    VMEM (1, C, H, W)   one input image
    o_ref:    VMEM (1, 1, H, W)   attention map output
    feat_ref: VMEM (2, H+2*PAD, W+2*PAD) scratch: zero-padded [avg; max] planes
    """
    h, wd = x_ref.shape[2], x_ref.shape[3]

    x = x_ref[0].astype(jnp.float32)          # (C, H, W)

    # Channel-wise mean & max: C is a major axis, so these are cheap
    # cross-vreg add/max chains on lane-dense (H, W) planes.
    avg = jnp.mean(x, axis=0)                 # (H, W)
    mx = jnp.max(x, axis=0)                   # (H, W)

    # Zero-initialised padded scratch => conv borders read zeros, exactly like
    # PyTorch's zero padding of the concatenated 2-channel feature map.
    feat_ref[...] = jnp.zeros_like(feat_ref)
    feat_ref[0, PAD:PAD + h, PAD:PAD + wd] = avg
    feat_ref[1, PAD:PAD + h, PAD:PAD + wd] = mx

    # 7x7 cross-correlation, Cin=2 -> Cout=1: 98 shifted scalar-broadcast FMAs
    # on the VPU (MXU is useless with a single output channel).
    acc = jnp.zeros((h, wd), jnp.float32)
    for c in range(2):
        for kh in range(K):
            for kw in range(K):
                wt = w_ref[c * K * K + kh * K + kw]            # scalar from SMEM
                acc = acc + wt * feat_ref[c, kh:kh + h, kw:kw + wd]

    # Sigmoid epilogue in f32 (exp -> EUP, divide -> VPU).
    o_ref[0, 0] = 1.0 / (1.0 + jnp.exp(-acc))


def spatial_attention(x, w):
    """x: (N, C, H, W) float32; w: (1, 2, K, K) PyTorch-layout conv1 weight."""
    n, c, h, wd = x.shape
    w_flat = w.reshape(-1).astype(jnp.float32)   # (2*K*K,), (c, kh, kw) order

    flops = n * (2 * c * h * wd + 2 * 2 * K * K * h * wd + 3 * h * wd)
    cost = pl.CostEstimate(
        flops=flops,
        transcendentals=n * h * wd,
        bytes_accessed=x.size * x.dtype.itemsize + w_flat.size * 4 + n * h * wd * 4,
    )

    return pl.pallas_call(
        spatial_attention_kernel,
        out_shape=jax.ShapeDtypeStruct((n, 1, h, wd), jnp.float32),
        grid_spec=pltpu.PrefetchScalarGridSpec(
            num_scalar_prefetch=0,
            grid=(n,),
            in_specs=[
                pl.BlockSpec(memory_space=pltpu.MemorySpace.SMEM),     # weights
                pl.BlockSpec((1, c, h, wd), lambda i: (i, 0, 0, 0)),   # one image
            ],
            out_specs=pl.BlockSpec((1, 1, h, wd), lambda i: (i, 0, 0, 0)),
            scratch_shapes=[
                pltpu.VMEM((2, h + 2 * PAD, wd + 2 * PAD), jnp.float32),
            ],
        ),
        compiler_params=pltpu.CompilerParams(
            dimension_semantics=("parallel",),
        ),
        cost_estimate=cost,
    )(w_flat, x)


def spatial_attention_ref(x, w):
    """Pure-JAX reference matching the PyTorch module (eval numerics, f32)."""
    avg = jnp.mean(x, axis=1, keepdims=True)
    mx = jnp.max(x, axis=1, keepdims=True)
    feat = jnp.concatenate([avg, mx], axis=1)                 # (N, 2, H, W)
    y = jax.lax.conv_general_dilated(
        feat, w, window_strides=(1, 1),
        padding=((PAD, PAD), (PAD, PAD)),
        dimension_numbers=("NCHW", "OIHW", "NCHW"),
        precision=jax.lax.Precision.HIGHEST,
    )
    return jax.nn.sigmoid(y)


if __name__ == "__main__":
    key = jax.random.PRNGKey(0)
    kx, kw = jax.random.split(key)

    N, C, H, W = 2, 4, 16, 16
    x = jax.random.normal(kx, (N, C, H, W), jnp.float32)

    # PyTorch Conv2d(2, 1, 7, bias=False) default init: U(-1/sqrt(fan_in), ...)
    bound = 1.0 / (2 * K * K) ** 0.5
    w = jax.random.uniform(kw, (1, 2, K, K), jnp.float32, -bound, bound)

    y = spatial_attention(x, w)
    jax.block_until_ready(y)

    y_ref = spatial_attention_ref(x, w)
    assert y.shape == (N, 1, H, W), y.shape
    assert bool(jnp.all((y > 0.0) & (y < 1.0)))               # sigmoid range
    max_err = float(jnp.max(jnp.abs(y - y_ref)))
    assert jnp.allclose(y, y_ref, atol=2e-5, rtol=2e-5), max_err
    print("KERNEL_OK")
</pallas_src>

<mosaic_0001>
module attributes {stable_mosaic.version = 11 : i64} {
  func.func @spatial_attention_kernel(%arg0: i32, %arg1: memref<98xf32, #tpu.memory_space<smem>>, %arg2: memref<1x4x16x16xf32, #tpu.memory_space<vmem>>, %arg3: memref<1x1x16x16xf32, #tpu.memory_space<vmem>>, %arg4: memref<2x22x22xf32, #tpu.memory_space<vmem>>) attributes {dimension_semantics = [#tpu.dimension_semantics<parallel>], iteration_bounds = array<i64: 2>, scalar_prefetch = 0 : i64, scratch_operands = 1 : i64, tpu.core_type = #tpu.core_type<tc>, window_params = [{transform_indices = @transform_0, window_bounds = array<i64: 98>}, {transform_indices = @transform_1, window_bounds = array<i64: 1, 4, 16, 16>}, {transform_indices = @transform_2, window_bounds = array<i64: 1, 1, 16, 16>}]} {
    %c0 = arith.constant 0 : index
    %c0_0 = arith.constant 0 : index
    %c0_1 = arith.constant 0 : index
    %c0_2 = arith.constant 0 : index
    %0 = vector.load %arg2[%c0, %c0_0, %c0_1, %c0_2] : memref<1x4x16x16xf32, #tpu.memory_space<vmem>>, vector<1x4x16x16xf32>
    %1 = vector.shape_cast %0 : vector<1x4x16x16xf32> to vector<4x16x16xf32>
    %cst = arith.constant dense<0.000000e+00> : vector<16x16xf32>
    %2 = vector.multi_reduction <add>, %1, %cst [0] : vector<4x16x16xf32> to vector<16x16xf32>
    %cst_3 = arith.constant 4.000000e+00 : f32
    %3 = vector.broadcast %cst_3 : f32 to vector<16x16xf32>
    %4 = arith.divf %2, %3 : vector<16x16xf32>
    %cst_4 = arith.constant dense<0xFF800000> : vector<16x16xf32>
    %5 = vector.multi_reduction <maximumf>, %1, %cst_4 [0] : vector<4x16x16xf32> to vector<16x16xf32>
    %cst_5 = arith.constant 0.000000e+00 : f32
    %6 = vector.broadcast %cst_5 : f32 to vector<2x22x22xf32>
    %c0_6 = arith.constant 0 : index
    %c0_7 = arith.constant 0 : index
    %c0_8 = arith.constant 0 : index
    %7 = vector.load %arg4[%c0_6, %c0_7, %c0_8] : memref<2x22x22xf32, #tpu.memory_space<vmem>>, vector<2x22x22xf32>
    tpu.vector_store %arg4[%c0_6, %c0_7, %c0_8], %6 {strides = array<i32>} : memref<2x22x22xf32, #tpu.memory_space<vmem>>, vector<2x22x22xf32>,
    %c0_9 = arith.constant 0 : index
    %c3 = arith.constant 3 : index
    %c3_10 = arith.constant 3 : index
    %8 = vector.load %arg4[%c0_9, %c3, %c3_10] : memref<2x22x22xf32, #tpu.memory_space<vmem>>, vector<1x16x16xf32>
    %9 = vector.shape_cast %8 : vector<1x16x16xf32> to vector<16x16xf32>
    %10 = vector.shape_cast %4 : vector<16x16xf32> to vector<1x16x16xf32>
    tpu.vector_store %arg4[%c0_9, %c3, %c3_10], %10 {strides = array<i32>} : memref<2x22x22xf32, #tpu.memory_space<vmem>>, vector<1x16x16xf32>,
    %c1 = arith.constant 1 : index
    %c3_11 = arith.constant 3 : index
    %c3_12 = arith.constant 3 : index
    %11 = vector.load %arg4[%c1, %c3_11, %c3_12] : memref<2x22x22xf32, #tpu.memory_space<vmem>>, vector<1x16x16xf32>
    %12 = vector.shape_cast %11 : vector<1x16x16xf32> to vector<16x16xf32>
    %13 = vector.shape_cast %5 : vector<16x16xf32> to vector<1x16x16xf32>
    tpu.vector_store %arg4[%c1, %c3_11, %c3_12], %13 {strides = array<i32>} : memref<2x22x22xf32, #tpu.memory_space<vmem>>, vector<1x16x16xf32>,
    %cst_13 = arith.constant 0.000000e+00 : f32
    %14 = vector.broadcast %cst_13 : f32 to vector<16x16xf32>
    %c0_14 = arith.constant 0 : index
    %15 = memref.load %arg1[%c0_14] : memref<98xf32, #tpu.memory_space<smem>>
    %c0_15 = arith.constant 0 : index
    %c0_16 = arith.constant 0 : index
    %c0_17 = arith.constant 0 : index
    %16 = vector.load %arg4[%c0_15, %c0_16, %c0_17] : memref<2x22x22xf32, #tpu.memory_space<vmem>>, vector<1x16x16xf32>
    %17 = vector.shape_cast %16 : vector<1x16x16xf32> to vector<16x16xf32>
    %18 = vector.broadcast %15 : f32 to vector<16x16xf32>
    %19 = arith.mulf %18, %17 : vector<16x16xf32>
    %20 = arith.addf %14, %19 : vector<16x16xf32>
    %c1_18 = arith.constant 1 : index
    %21 = memref.load %arg1[%c1_18] : memref<98xf32, #tpu.memory_space<smem>>
    %c0_19 = arith.constant 0 : index
    %c0_20 = arith.constant 0 : index
    %c1_21 = arith.constant 1 : index
    %22 = vector.load %arg4[%c0_19, %c0_20, %c1_21] : memref<2x22x22xf32, #tpu.memory_space<vmem>>, vector<1x16x16xf32>
    %23 = vector.shape_cast %22 : vector<1x16x16xf32> to vector<16x16xf32>
    %24 = vector.broadcast %21 : f32 to vector<16x16xf32>
    %25 = arith.mulf %24, %23 : vector<16x16xf32>
    %26 = arith.addf %20, %25 : vector<16x16xf32>
    %c2 = arith.constant 2 : index
    %27 = memref.load %arg1[%c2] : memref<98xf32, #tpu.memory_space<smem>>
    %c0_22 = arith.constant 0 : index
    %c0_23 = arith.constant 0 : index
    %c2_24 = arith.constant 2 : index
    %28 = vector.load %arg4[%c0_22, %c0_23, %c2_24] : memref<2x22x22xf32, #tpu.memory_space<vmem>>, vector<1x16x16xf32>
    %29 = vector.shape_cast %28 : vector<1x16x16xf32> to vector<16x16xf32>
    %30 = vector.broadcast %27 : f32 to vector<16x16xf32>
    %31 = arith.mulf %30, %29 : vector<16x16xf32>
    %32 = arith.addf %26, %31 : vector<16x16xf32>
    %c3_25 = arith.constant 3 : index
    %33 = memref.load %arg1[%c3_25] : memref<98xf32, #tpu.memory_space<smem>>
    %c0_26 = arith.constant 0 : index
    %c0_27 = arith.constant 0 : index
    %c3_28 = arith.constant 3 : index
    %34 = vector.load %arg4[%c0_26, %c0_27, %c3_28] : memref<2x22x22xf32, #tpu.memory_space<vmem>>, vector<1x16x16xf32>
    %35 = vector.shape_cast %34 : vector<1x16x16xf32> to vector<16x16xf32>
    %36 = vector.broadcast %33 : f32 to vector<16x16xf32>
    %37 = arith.mulf %36, %35 : vector<16x16xf32>
    %38 = arith.addf %32, %37 : vector<16x16xf32>
    %c4 = arith.constant 4 : index
    %39 = memref.load %arg1[%c4] : memref<98xf32, #tpu.memory_space<smem>>
    %c0_29 = arith.constant 0 : index
    %c0_30 = arith.constant 0 : index
    %c4_31 = arith.constant 4 : index
    %40 = vector.load %arg4[%c0_29, %c0_30, %c4_31] : memref<2x22x22xf32, #tpu.memory_space<vmem>>, vector<1x16x16xf32>
    %41 = vector.shape_cast %40 : vector<1x16x16xf32> to vector<16x16xf32>
    %42 = vector.broadcast %39 : f32 to vector<16x16xf32>
    %43 = arith.mulf %42, %41 : vector<16x16xf32>
    %44 = arith.addf %38, %43 : vector<16x16xf32>
    %c5 = arith.constant 5 : index
    %45 = memref.load %arg1[%c5] : memref<98xf32, #tpu.memory_space<smem>>
    %c0_32 = arith.constant 0 : index
    %c0_33 = arith.constant 0 : index
    %c5_34 = arith.constant 5 : index
    %46 = vector.load %arg4[%c0_32, %c0_33, %c5_34] : memref<2x22x22xf32, #tpu.memory_space<vmem>>, vector<1x16x16xf32>
    %47 = vector.shape_cast %46 : vector<1x16x16xf32> to vector<16x16xf32>
    %48 = vector.broadcast %45 : f32 to vector<16x16xf32>
    %49 = arith.mulf %48, %47 : vector<16x16xf32>
    %50 = arith.addf %44, %49 : vector<16x16xf32>
    %c6 = arith.constant 6 : index
    %51 = memref.load %arg1[%c6] : memref<98xf32, #tpu.memory_space<smem>>
    %c0_35 = arith.constant 0 : index
    %c0_36 = arith.constant 0 : index
    %c6_37 = arith.constant 6 : index
    %52 = vector.load %arg4[%c0_35, %c0_36, %c6_37] : memref<2x22x22xf32, #tpu.memory_space<vmem>>, vector<1x16x16xf32>
    %53 = vector.shape_cast %52 : vector<1x16x16xf32> to vector<16x16xf32>
    %54 = vector.broadcast %51 : f32 to vector<16x16xf32>
    %55 = arith.mulf %54, %53 : vector<16x16xf32>
    %56 = arith.addf %50, %55 : vector<16x16xf32>
    %c7 = arith.constant 7 : index
    %57 = memref.load %arg1[%c7] : memref<98xf32, #tpu.memory_space<smem>>
    %c0_38 = arith.constant 0 : index
    %c1_39 = arith.constant 1 : index
    %c0_40 = arith.constant 0 : index
    %58 = vector.load %arg4[%c0_38, %c1_39, %c0_40] : memref<2x22x22xf32, #tpu.memory_space<vmem>>, vector<1x16x16xf32>
    %59 = vector.shape_cast %58 : vector<1x16x16xf32> to vector<16x16xf32>
    %60 = vector.broadcast %57 : f32 to vector<16x16xf32>
    %61 = arith.mulf %60, %59 : vector<16x16xf32>
    %62 = arith.addf %56, %61 : vector<16x16xf32>
    %c8 = arith.constant 8 : index
    %63 = memref.load %arg1[%c8] : memref<98xf32, #tpu.memory_space<smem>>
    %c0_41 = arith.constant 0 : index
    %c1_42 = arith.constant 1 : index
    %c1_43 = arith.constant 1 : index
    %64 = vector.load %arg4[%c0_41, %c1_42, %c1_43] : memref<2x22x22xf32, #tpu.memory_space<vmem>>, vector<1x16x16xf32>
    %65 = vector.shape_cast %64 : vector<1x16x16xf32> to vector<16x16xf32>
    %66 = vector.broadcast %63 : f32 to vector<16x16xf32>
    %67 = arith.mulf %66, %65 : vector<16x16xf32>
    %68 = arith.addf %62, %67 : vector<16x16xf32>
    %c9 = arith.constant 9 : index
    %69 = memref.load %arg1[%c9] : memref<98xf32, #tpu.memory_space<smem>>
    %c0_44 = arith.constant 0 : index
    %c1_45 = arith.constant 1 : index
    %c2_46 = arith.constant 2 : index
    %70 = vector.load %arg4[%c0_44, %c1_45, %c2_46] : memref<2x22x22xf32, #tpu.memory_space<vmem>>, vector<1x16x16xf32>
    %71 = vector.shape_cast %70 : vector<1x16x16xf32> to vector<16x16xf32>
    %72 = vector.broadcast %69 : f32 to vector<16x16xf32>
    %73 = arith.mulf %72, %71 : vector<16x16xf32>
    %74 = arith.addf %68, %73 : vector<16x16xf32>
    %c10 = arith.constant 10 : index
    %75 = memref.load %arg1[%c10] : memref<98xf32, #tpu.memory_space<smem>>
    %c0_47 = arith.constant 0 : index
    %c1_48 = arith.constant 1 : index
    %c3_49 = arith.constant 3 : index
    %76 = vector.load %arg4[%c0_47, %c1_48, %c3_49] : memref<2x22x22xf32, #tpu.memory_space<vmem>>, vector<1x16x16xf32>
    %77 = vector.shape_cast %76 : vector<1x16x16xf32> to vector<16x16xf32>
    %78 = vector.broadcast %75 : f32 to vector<16x16xf32>
    %79 = arith.mulf %78, %77 : vector<16x16xf32>
    %80 = arith.addf %74, %79 : vector<16x16xf32>
    %c11 = arith.constant 11 : index
    %81 = memref.load %arg1[%c11] : memref<98xf32, #tpu.memory_space<smem>>
    %c0_50 = arith.constant 0 : index
    %c1_51 = arith.constant 1 : index
    %c4_52 = arith.constant 4 : index
    %82 = vector.load %arg4[%c0_50, %c1_51, %c4_52] : memref<2x22x22xf32, #tpu.memory_space<vmem>>, vector<1x16x16xf32>
    %83 = vector.shape_cast %82 : vector<1x16x16xf32> to vector<16x16xf32>
    %84 = vector.broadcast %81 : f32 to vector<16x16xf32>
    %85 = arith.mulf %84, %83 : vector<16x16xf32>
    %86 = arith.addf %80, %85 : vector<16x16xf32>
    %c12 = arith.constant 12 : index
    %87 = memref.load %arg1[%c12] : memref<98xf32, #tpu.memory_space<smem>>
    %c0_53 = arith.constant 0 : index
    %c1_54 = arith.constant 1 : index
    %c5_55 = arith.constant 5 : index
    %88 = vector.load %arg4[%c0_53, %c1_54, %c5_55] : memref<2x22x22xf32, #tpu.memory_space<vmem>>, vector<1x16x16xf32>
    %89 = vector.shape_cast %88 : vector<1x16x16xf32> to vector<16x16xf32>
    %90 = vector.broadcast %87 : f32 to vector<16x16xf32>
    %91 = arith.mulf %90, %89 : vector<16x16xf32>
    %92 = arith.addf %86, %91 : vector<16x16xf32>
    %c13 = arith.constant 13 : index
    %93 = memref.load %arg1[%c13] : memref<98xf32, #tpu.memory_space<smem>>
    %c0_56 = arith.constant 0 : index
    %c1_57 = arith.constant 1 : index
    %c6_58 = arith.constant 6 : index
    %94 = vector.load %arg4[%c0_56, %c1_57, %c6_58] : memref<2x22x22xf32, #tpu.memory_space<vmem>>, vector<1x16x16xf32>
    %95 = vector.shape_cast %94 : vector<1x16x16xf32> to vector<16x16xf32>
    %96 = vector.broadcast %93 : f32 to vector<16x16xf32>
    %97 = arith.mulf %96, %95 : vector<16x16xf32>
    %98 = arith.addf %92, %97 : vector<16x16xf32>
    %c14 = arith.constant 14 : index
    %99 = memref.load %arg1[%c14] : memref<98xf32, #tpu.memory_space<smem>>
    %c0_59 = arith.constant 0 : index
    %c2_60 = arith.constant 2 : index
    %c0_61 = arith.constant 0 : index
    %100 = vector.load %arg4[%c0_59, %c2_60, %c0_61] : memref<2x22x22xf32, #tpu.memory_space<vmem>>, vector<1x16x16xf32>
    %101 = vector.shape_cast %100 : vector<1x16x16xf32> to vector<16x16xf32>
    %102 = vector.broadcast %99 : f32 to vector<16x16xf32>
    %103 = arith.mulf %102, %101 : vector<16x16xf32>
    %104 = arith.addf %98, %103 : vector<16x16xf32>
    %c15 = arith.constant 15 : index
    %105 = memref.load %arg1[%c15] : memref<98xf32, #tpu.memory_space<smem>>
    %c0_62 = arith.constant 0 : index
    %c2_63 = arith.constant 2 : index
    %c1_64 = arith.constant 1 : index
    %106 = vector.load %arg4[%c0_62, %c2_63, %c1_64] : memref<2x22x22xf32, #tpu.memory_space<vmem>>, vector<1x16x16xf32>
    %107 = vector.shape_cast %106 : vector<1x16x16xf32> to vector<16x16xf32>
    %108 = vector.broadcast %105 : f32 to vector<16x16xf32>
    %109 = arith.mulf %108, %107 : vector<16x16xf32>
    %110 = arith.addf %104, %109 : vector<16x16xf32>
    %c16 = arith.constant 16 : index
    %111 = memref.load %arg1[%c16] : memref<98xf32, #tpu.memory_space<smem>>
    %c0_65 = arith.constant 0 : index
    %c2_66 = arith.constant 2 : index
    %c2_67 = arith.constant 2 : index
    %112 = vector.load %arg4[%c0_65, %c2_66, %c2_67] : memref<2x22x22xf32, #tpu.memory_space<vmem>>, vector<1x16x16xf32>
    %113 = vector.shape_cast %112 : vector<1x16x16xf32> to vector<16x16xf32>
    %114 = vector.broadcast %111 : f32 to vector<16x16xf32>
    %115 = arith.mulf %114, %113 : vector<16x16xf32>
    %116 = arith.addf %110, %115 : vector<16x16xf32>
    %c17 = arith.constant 17 : index
    %117 = memref.load %arg1[%c17] : memref<98xf32, #tpu.memory_space<smem>>
    %c0_68 = arith.constant 0 : index
    %c2_69 = arith.constant 2 : index
    %c3_70 = arith.constant 3 : index
    %118 = vector.load %arg4[%c0_68, %c2_69, %c3_70] : memref<2x22x22xf32, #tpu.memory_space<vmem>>, vector<1x16x16xf32>
    %119 = vector.shape_cast %118 : vector<1x16x16xf32> to vector<16x16xf32>
    %120 = vector.broadcast %117 : f32 to vector<16x16xf32>
    %121 = arith.mulf %120, %119 : vector<16x16xf32>
    %122 = arith.addf %116, %121 : vector<16x16xf32>
    %c18 = arith.constant 18 : index
    %123 = memref.load %arg1[%c18] : memref<98xf32, #tpu.memory_space<smem>>
    %c0_71 = arith.constant 0 : index
    %c2_72 = arith.constant 2 : index
    %c4_73 = arith.constant 4 : index
    %124 = vector.load %arg4[%c0_71, %c2_72, %c4_73] : memref<2x22x22xf32, #tpu.memory_space<vmem>>, vector<1x16x16xf32>
    %125 = vector.shape_cast %124 : vector<1x16x16xf32> to vector<16x16xf32>
    %126 = vector.broadcast %123 : f32 to vector<16x16xf32>
    %127 = arith.mulf %126, %125 : vector<16x16xf32>
    %128 = arith.addf %122, %127 : vector<16x16xf32>
    %c19 = arith.constant 19 : index
    %129 = memref.load %arg1[%c19] : memref<98xf32, #tpu.memory_space<smem>>
    %c0_74 = arith.constant 0 : index
    %c2_75 = arith.constant 2 : index
    %c5_76 = arith.constant 5 : index
    %130 = vector.load %arg4[%c0_74, %c2_75, %c5_76] : memref<2x22x22xf32, #tpu.memory_space<vmem>>, vector<1x16x16xf32>
    %131 = vector.shape_cast %130 : vector<1x16x16xf32> to vector<16x16xf32>
    %132 = vector.broadcast %129 : f32 to vector<16x16xf32>
    %133 = arith.mulf %132, %131 : vector<16x16xf32>
    %134 = arith.addf %128, %133 : vector<16x16xf32>
    %c20 = arith.constant 20 : index
    %135 = memref.load %arg1[%c20] : memref<98xf32, #tpu.memory_space<smem>>
    %c0_77 = arith.constant 0 : index
    %c2_78 = arith.constant 2 : index
    %c6_79 = arith.constant 6 : index
    %136 = vector.load %arg4[%c0_77, %c2_78, %c6_79] : memref<2x22x22xf32, #tpu.memory_space<vmem>>, vector<1x16x16xf32>
    %137 = vector.shape_cast %136 : vector<1x16x16xf32> to vector<16x16xf32>
    %138 = vector.broadcast %135 : f32 to vector<16x16xf32>
    %139 = arith.mulf %138, %137 : vector<16x16xf32>
    %140 = arith.addf %134, %139 : vector<16x16xf32>
    %c21 = arith.constant 21 : index
    %141 = memref.load %arg1[%c21] : memref<98xf32, #tpu.memory_space<smem>>
    %c0_80 = arith.constant 0 : index
    %c3_81 = arith.constant 3 : index
    %c0_82 = arith.constant 0 : index
    %142 = vector.load %arg4[%c0_80, %c3_81, %c0_82] : memref<2x22x22xf32, #tpu.memory_space<vmem>>, vector<1x16x16xf32>
    %143 = vector.shape_cast %142 : vector<1x16x16xf32> to vector<16x16xf32>
    %144 = vector.broadcast %141 : f32 to vector<16x16xf32>
    %145 = arith.mulf %144, %143 : vector<16x16xf32>
    %146 = arith.addf %140, %145 : vector<16x16xf32>
    %c22 = arith.constant 22 : index
    %147 = memref.load %arg1[%c22] : memref<98xf32, #tpu.memory_space<smem>>
    %c0_83 = arith.constant 0 : index
    %c3_84 = arith.constant 3 : index
    %c1_85 = arith.constant 1 : index
    %148 = vector.load %arg4[%c0_83, %c3_84, %c1_85] : memref<2x22x22xf32, #tpu.memory_space<vmem>>, vector<1x16x16xf32>
    %149 = vector.shape_cast %148 : vector<1x16x16xf32> to vector<16x16xf32>
    %150 = vector.broadcast %147 : f32 to vector<16x16xf32>
    %151 = arith.mulf %150, %149 : vector<16x16xf32>
    %152 = arith.addf %146, %151 : vector<16x16xf32>
    %c23 = arith.constant 23 : index
    %153 = memref.load %arg1[%c23] : memref<98xf32, #tpu.memory_space<smem>>
    %c0_86 = arith.constant 0 : index
    %c3_87 = arith.constant 3 : index
    %c2_88 = arith.constant 2 : index
    %154 = vector.load %arg4[%c0_86, %c3_87, %c2_88] : memref<2x22x22xf32, #tpu.memory_space<vmem>>, vector<1x16x16xf32>
    %155 = vector.shape_cast %154 : vector<1x16x16xf32> to vector<16x16xf32>
    %156 = vector.broadcast %153 : f32 to vector<16x16xf32>
    %157 = arith.mulf %156, %155 : vector<16x16xf32>
    %158 = arith.addf %152, %157 : vector<16x16xf32>
    %c24 = arith.constant 24 : index
    %159 = memref.load %arg1[%c24] : memref<98xf32, #tpu.memory_space<smem>>
    %c0_89 = arith.constant 0 : index
    %c3_90 = arith.constant 3 : index
    %c3_91 = arith.constant 3 : index
    %160 = vector.load %arg4[%c0_89, %c3_90, %c3_91] : memref<2x22x22xf32, #tpu.memory_space<vmem>>, vector<1x16x16xf32>
    %161 = vector.shape_cast %160 : vector<1x16x16xf32> to vector<16x16xf32>
    %162 = vector.broadcast %159 : f32 to vector<16x16xf32>
    %163 = arith.mulf %162, %161 : vector<16x16xf32>
    %164 = arith.addf %158, %163 : vector<16x16xf32>
    %c25 = arith.constant 25 : index
    %165 = memref.load %arg1[%c25] : memref<98xf32, #tpu.memory_space<smem>>
    %c0_92 = arith.constant 0 : index
    %c3_93 = arith.constant 3 : index
    %c4_94 = arith.constant 4 : index
    %166 = vector.load %arg4[%c0_92, %c3_93, %c4_94] : memref<2x22x22xf32, #tpu.memory_space<vmem>>, vector<1x16x16xf32>
    %167 = vector.shape_cast %166 : vector<1x16x16xf32> to vector<16x16xf32>
    %168 = vector.broadcast %165 : f32 to vector<16x16xf32>
    %169 = arith.mulf %168, %167 : vector<16x16xf32>
    %170 = arith.addf %164, %169 : vector<16x16xf32>
    %c26 = arith.constant 26 : index
    %171 = memref.load %arg1[%c26] : memref<98xf32, #tpu.memory_space<smem>>
    %c0_95 = arith.constant 0 : index
    %c3_96 = arith.constant 3 : index
    %c5_97 = arith.constant 5 : index
    %172 = vector.load %arg4[%c0_95, %c3_96, %c5_97] : memref<2x22x22xf32, #tpu.memory_space<vmem>>, vector<1x16x16xf32>
    %173 = vector.shape_cast %172 : vector<1x16x16xf32> to vector<16x16xf32>
    %174 = vector.broadcast %171 : f32 to vector<16x16xf32>
    %175 = arith.mulf %174, %173 : vector<16x16xf32>
    %176 = arith.addf %170, %175 : vector<16x16xf32>
    %c27 = arith.constant 27 : index
    %177 = memref.load %arg1[%c27] : memref<98xf32, #tpu.memory_space<smem>>
    %c0_98 = arith.constant 0 : index
    %c3_99 = arith.constant 3 : index
    %c6_100 = arith.constant 6 : index
    %178 = vector.load %arg4[%c0_98, %c3_99, %c6_100] : memref<2x22x22xf32, #tpu.memory_space<vmem>>, vector<1x16x16xf32>
    %179 = vector.shape_cast %178 : vector<1x16x16xf32> to vector<16x16xf32>
    %180 = vector.broadcast %177 : f32 to vector<16x16xf32>
    %181 = arith.mulf %180, %179 : vector<16x16xf32>
    %182 = arith.addf %176, %181 : vector<16x16xf32>
    %c28 = arith.constant 28 : index
    %183 = memref.load %arg1[%c28] : memref<98xf32, #tpu.memory_space<smem>>
    %c0_101 = arith.constant 0 : index
    %c4_102 = arith.constant 4 : index
    %c0_103 = arith.constant 0 : index
    %184 = vector.load %arg4[%c0_101, %c4_102, %c0_103] : memref<2x22x22xf32, #tpu.memory_space<vmem>>, vector<1x16x16xf32>
    %185 = vector.shape_cast %184 : vector<1x16x16xf32> to vector<16x16xf32>
    %186 = vector.broadcast %183 : f32 to vector<16x16xf32>
    %187 = arith.mulf %186, %185 : vector<16x16xf32>
    %188 = arith.addf %182, %187 : vector<16x16xf32>
    %c29 = arith.constant 29 : index
    %189 = memref.load %arg1[%c29] : memref<98xf32, #tpu.memory_space<smem>>
    %c0_104 = arith.constant 0 : index
    %c4_105 = arith.constant 4 : index
    %c1_106 = arith.constant 1 : index
    %190 = vector.load %arg4[%c0_104, %c4_105, %c1_106] : memref<2x22x22xf32, #tpu.memory_space<vmem>>, vector<1x16x16xf32>
    %191 = vector.shape_cast %190 : vector<1x16x16xf32> to vector<16x16xf32>
    %192 = vector.broadcast %189 : f32 to vector<16x16xf32>
    %193 = arith.mulf %192, %191 : vector<16x16xf32>
    %194 = arith.addf %188, %193 : vector<16x16xf32>
    %c30 = arith.constant 30 : index
    %195 = memref.load %arg1[%c30] : memref<98xf32, #tpu.memory_space<smem>>
    %c0_107 = arith.constant 0 : index
    %c4_108 = arith.constant 4 : index
    %c2_109 = arith.constant 2 : index
    %196 = vector.load %arg4[%c0_107, %c4_108, %c2_109] : memref<2x22x22xf32, #tpu.memory_space<vmem>>, vector<1x16x16xf32>
    %197 = vector.shape_cast %196 : vector<1x16x16xf32> to vector<16x16xf32>
    %198 = vector.broadcast %195 : f32 to vector<16x16xf32>
    %199 = arith.mulf %198, %197 : vector<16x16xf32>
    %200 = arith.addf %194, %199 : vector<16x16xf32>
    %c31 = arith.constant 31 : index
    %201 = memref.load %arg1[%c31] : memref<98xf32, #tpu.memory_space<smem>>
    %c0_110 = arith.constant 0 : index
    %c4_111 = arith.constant 4 : index
    %c3_112 = arith.constant 3 : index
    %202 = vector.load %arg4[%c0_110, %c4_111, %c3_112] : memref<2x22x22xf32, #tpu.memory_space<vmem>>, vector<1x16x16xf32>
    %203 = vector.shape_cast %202 : vector<1x16x16xf32> to vector<16x16xf32>
    %204 = vector.broadcast %201 : f32 to vector<16x16xf32>
    %205 = arith.mulf %204, %203 : vector<16x16xf32>
    %206 = arith.addf %200, %205 : vector<16x16xf32>
    %c32 = arith.constant 32 : index
    %207 = memref.load %arg1[%c32] : memref<98xf32, #tpu.memory_space<smem>>
    %c0_113 = arith.constant 0 : index
    %c4_114 = arith.constant 4 : index
    %c4_115 = arith.constant 4 : index
    %208 = vector.load %arg4[%c0_113, %c4_114, %c4_115] : memref<2x22x22xf32, #tpu.memory_space<vmem>>, vector<1x16x16xf32>
    %209 = vector.shape_cast %208 : vector<1x16x16xf32> to vector<16x16xf32>
    %210 = vector.broadcast %207 : f32 to vector<16x16xf32>
    %211 = arith.mulf %210, %209 : vector<16x16xf32>
    %212 = arith.addf %206, %211 : vector<16x16xf32>
    %c33 = arith.constant 33 : index
    %213 = memref.load %arg1[%c33] : memref<98xf32, #tpu.memory_space<smem>>
    %c0_116 = arith.constant 0 : index
    %c4_117 = arith.constant 4 : index
    %c5_118 = arith.constant 5 : index
    %214 = vector.load %arg4[%c0_116, %c4_117, %c5_118] : memref<2x22x22xf32, #tpu.memory_space<vmem>>, vector<1x16x16xf32>
    %215 = vector.shape_cast %214 : vector<1x16x16xf32> to vector<16x16xf32>
    %216 = vector.broadcast %213 : f32 to vector<16x16xf32>
    %217 = arith.mulf %216, %215 : vector<16x16xf32>
    %218 = arith.addf %212, %217 : vector<16x16xf32>
    %c34 = arith.constant 34 : index
    %219 = memref.load %arg1[%c34] : memref<98xf32, #tpu.memory_space<smem>>
    %c0_119 = arith.constant 0 : index
    %c4_120 = arith.constant 4 : index
    %c6_121 = arith.constant 6 : index
    %220 = vector.load %arg4[%c0_119, %c4_120, %c6_121] : memref<2x22x22xf32, #tpu.memory_space<vmem>>, vector<1x16x16xf32>
    %221 = vector.shape_cast %220 : vector<1x16x16xf32> to vector<16x16xf32>
    %222 = vector.broadcast %219 : f32 to vector<16x16xf32>
    %223 = arith.mulf %222, %221 : vector<16x16xf32>
    %224 = arith.addf %218, %223 : vector<16x16xf32>
    %c35 = arith.constant 35 : index
    %225 = memref.load %arg1[%c35] : memref<98xf32, #tpu.memory_space<smem>>
    %c0_122 = arith.constant 0 : index
    %c5_123 = arith.constant 5 : index
    %c0_124 = arith.constant 0 : index
    %226 = vector.load %arg4[%c0_122, %c5_123, %c0_124] : memref<2x22x22xf32, #tpu.memory_space<vmem>>, vector<1x16x16xf32>
    %227 = vector.shape_cast %226 : vector<1x16x16xf32> to vector<16x16xf32>
    %228 = vector.broadcast %225 : f32 to vector<16x16xf32>
    %229 = arith.mulf %228, %227 : vector<16x16xf32>
    %230 = arith.addf %224, %229 : vector<16x16xf32>
    %c36 = arith.constant 36 : index
    %231 = memref.load %arg1[%c36] : memref<98xf32, #tpu.memory_space<smem>>
    %c0_125 = arith.constant 0 : index
    %c5_126 = arith.constant 5 : index
    %c1_127 = arith.constant 1 : index
    %232 = vector.load %arg4[%c0_125, %c5_126, %c1_127] : memref<2x22x22xf32, #tpu.memory_space<vmem>>, vector<1x16x16xf32>
    %233 = vector.shape_cast %232 : vector<1x16x16xf32> to vector<16x16xf32>
    %234 = vector.broadcast %231 : f32 to vector<16x16xf32>
    %235 = arith.mulf %234, %233 : vector<16x16xf32>
    %236 = arith.addf %230, %235 : vector<16x16xf32>
    %c37 = arith.constant 37 : index
    %237 = memref.load %arg1[%c37] : memref<98xf32, #tpu.memory_space<smem>>
    %c0_128 = arith.constant 0 : index
    %c5_129 = arith.constant 5 : index
    %c2_130 = arith.constant 2 : index
    %238 = vector.load %arg4[%c0_128, %c5_129, %c2_130] : memref<2x22x22xf32, #tpu.memory_space<vmem>>, vector<1x16x16xf32>
    %239 = vector.shape_cast %238 : vector<1x16x16xf32> to vector<16x16xf32>
    %240 = vector.broadcast %237 : f32 to vector<16x16xf32>
    %241 = arith.mulf %240, %239 : vector<16x16xf32>
    %242 = arith.addf %236, %241 : vector<16x16xf32>
    %c38 = arith.constant 38 : index
    %243 = memref.load %arg1[%c38] : memref<98xf32, #tpu.memory_space<smem>>
    %c0_131 = arith.constant 0 : index
    %c5_132 = arith.constant 5 : index
    %c3_133 = arith.constant 3 : index
    %244 = vector.load %arg4[%c0_131, %c5_132, %c3_133] : memref<2x22x22xf32, #tpu.memory_space<vmem>>, vector<1x16x16xf32>
    %245 = vector.shape_cast %244 : vector<1x16x16xf32> to vector<16x16xf32>
    %246 = vector.broadcast %243 : f32 to vector<16x16xf32>
    %247 = arith.mulf %246, %245 : vector<16x16xf32>
    %248 = arith.addf %242, %247 : vector<16x16xf32>
    %c39 = arith.constant 39 : index
    %249 = memref.load %arg1[%c39] : memref<98xf32, #tpu.memory_space<smem>>
    %c0_134 = arith.constant 0 : index
    %c5_135 = arith.constant 5 : index
    %c4_136 = arith.constant 4 : index
    %250 = vector.load %arg4[%c0_134, %c5_135, %c4_136] : memref<2x22x22xf32, #tpu.memory_space<vmem>>, vector<1x16x16xf32>
    %251 = vector.shape_cast %250 : vector<1x16x16xf32> to vector<16x16xf32>
    %252 = vector.broadcast %249 : f32 to vector<16x16xf32>
    %253 = arith.mulf %252, %251 : vector<16x16xf32>
    %254 = arith.addf %248, %253 : vector<16x16xf32>
    %c40 = arith.constant 40 : index
    %255 = memref.load %arg1[%c40] : memref<98xf32, #tpu.memory_space<smem>>
    %c0_137 = arith.constant 0 : index
    %c5_138 = arith.constant 5 : index
    %c5_139 = arith.constant 5 : index
    %256 = vector.load %arg4[%c0_137, %c5_138, %c5_139] : memref<2x22x22xf32, #tpu.memory_space<vmem>>, vector<1x16x16xf32>
    %257 = vector.shape_cast %256 : vector<1x16x16xf32> to vector<16x16xf32>
    %258 = vector.broadcast %255 : f32 to vector<16x16xf32>
    %259 = arith.mulf %258, %257 : vector<16x16xf32>
    %260 = arith.addf %254, %259 : vector<16x16xf32>
    %c41 = arith.constant 41 : index
    %261 = memref.load %arg1[%c41] : memref<98xf32, #tpu.memory_space<smem>>
    %c0_140 = arith.constant 0 : index
    %c5_141 = arith.constant 5 : index
    %c6_142 = arith.constant 6 : index
    %262 = vector.load %arg4[%c0_140, %c5_141, %c6_142] : memref<2x22x22xf32, #tpu.memory_space<vmem>>, vector<1x16x16xf32>
    %263 = vector.shape_cast %262 : vector<1x16x16xf32> to vector<16x16xf32>
    %264 = vector.broadcast %261 : f32 to vector<16x16xf32>
    %265 = arith.mulf %264, %263 : vector<16x16xf32>
    %266 = arith.addf %260, %265 : vector<16x16xf32>
    %c42 = arith.constant 42 : index
    %267 = memref.load %arg1[%c42] : memref<98xf32, #tpu.memory_space<smem>>
    %c0_143 = arith.constant 0 : index
    %c6_144 = arith.constant 6 : index
    %c0_145 = arith.constant 0 : index
    %268 = vector.load %arg4[%c0_143, %c6_144, %c0_145] : memref<2x22x22xf32, #tpu.memory_space<vmem>>, vector<1x16x16xf32>
    %269 = vector.shape_cast %268 : vector<1x16x16xf32> to vector<16x16xf32>
    %270 = vector.broadcast %267 : f32 to vector<16x16xf32>
    %271 = arith.mulf %270, %269 : vector<16x16xf32>
    %272 = arith.addf %266, %271 : vector<16x16xf32>
    %c43 = arith.constant 43 : index
    %273 = memref.load %arg1[%c43] : memref<98xf32, #tpu.memory_space<smem>>
    %c0_146 = arith.constant 0 : index
    %c6_147 = arith.constant 6 : index
    %c1_148 = arith.constant 1 : index
    %274 = vector.load %arg4[%c0_146, %c6_147, %c1_148] : memref<2x22x22xf32, #tpu.memory_space<vmem>>, vector<1x16x16xf32>
    %275 = vector.shape_cast %274 : vector<1x16x16xf32> to vector<16x16xf32>
    %276 = vector.broadcast %273 : f32 to vector<16x16xf32>
    %277 = arith.mulf %276, %275 : vector<16x16xf32>
    %278 = arith.addf %272, %277 : vector<16x16xf32>
    %c44 = arith.constant 44 : index
    %279 = memref.load %arg1[%c44] : memref<98xf32, #tpu.memory_space<smem>>
    %c0_149 = arith.constant 0 : index
    %c6_150 = arith.constant 6 : index
    %c2_151 = arith.constant 2 : index
    %280 = vector.load %arg4[%c0_149, %c6_150, %c2_151] : memref<2x22x22xf32, #tpu.memory_space<vmem>>, vector<1x16x16xf32>
    %281 = vector.shape_cast %280 : vector<1x16x16xf32> to vector<16x16xf32>
    %282 = vector.broadcast %279 : f32 to vector<16x16xf32>
    %283 = arith.mulf %282, %281 : vector<16x16xf32>
    %284 = arith.addf %278, %283 : vector<16x16xf32>
    %c45 = arith.constant 45 : index
    %285 = memref.load %arg1[%c45] : memref<98xf32, #tpu.memory_space<smem>>
    %c0_152 = arith.constant 0 : index
    %c6_153 = arith.constant 6 : index
    %c3_154 = arith.constant 3 : index
    %286 = vector.load %arg4[%c0_152, %c6_153, %c3_154] : memref<2x22x22xf32, #tpu.memory_space<vmem>>, vector<1x16x16xf32>
    %287 = vector.shape_cast %286 : vector<1x16x16xf32> to vector<16x16xf32>
    %288 = vector.broadcast %285 : f32 to vector<16x16xf32>
    %289 = arith.mulf %288, %287 : vector<16x16xf32>
    %290 = arith.addf %284, %289 : vector<16x16xf32>
    %c46 = arith.constant 46 : index
    %291 = memref.load %arg1[%c46] : memref<98xf32, #tpu.memory_space<smem>>
    %c0_155 = arith.constant 0 : index
    %c6_156 = arith.constant 6 : index
    %c4_157 = arith.constant 4 : index
    %292 = vector.load %arg4[%c0_155, %c6_156, %c4_157] : memref<2x22x22xf32, #tpu.memory_space<vmem>>, vector<1x16x16xf32>
    %293 = vector.shape_cast %292 : vector<1x16x16xf32> to vector<16x16xf32>
    %294 = vector.broadcast %291 : f32 to vector<16x16xf32>
    %295 = arith.mulf %294, %293 : vector<16x16xf32>
    %296 = arith.addf %290, %295 : vector<16x16xf32>
    %c47 = arith.constant 47 : index
    %297 = memref.load %arg1[%c47] : memref<98xf32, #tpu.memory_space<smem>>
    %c0_158 = arith.constant 0 : index
    %c6_159 = arith.constant 6 : index
    %c5_160 = arith.constant 5 : index
    %298 = vector.load %arg4[%c0_158, %c6_159, %c5_160] : memref<2x22x22xf32, #tpu.memory_space<vmem>>, vector<1x16x16xf32>
    %299 = vector.shape_cast %298 : vector<1x16x16xf32> to vector<16x16xf32>
    %300 = vector.broadcast %297 : f32 to vector<16x16xf32>
    %301 = arith.mulf %300, %299 : vector<16x16xf32>
    %302 = arith.addf %296, %301 : vector<16x16xf32>
    %c48 = arith.constant 48 : index
    %303 = memref.load %arg1[%c48] : memref<98xf32, #tpu.memory_space<smem>>
    %c0_161 = arith.constant 0 : index
    %c6_162 = arith.constant 6 : index
    %c6_163 = arith.constant 6 : index
    %304 = vector.load %arg4[%c0_161, %c6_162, %c6_163] : memref<2x22x22xf32, #tpu.memory_space<vmem>>, vector<1x16x16xf32>
    %305 = vector.shape_cast %304 : vector<1x16x16xf32> to vector<16x16xf32>
    %306 = vector.broadcast %303 : f32 to vector<16x16xf32>
    %307 = arith.mulf %306, %305 : vector<16x16xf32>
    %308 = arith.addf %302, %307 : vector<16x16xf32>
    %c49 = arith.constant 49 : index
    %309 = memref.load %arg1[%c49] : memref<98xf32, #tpu.memory_space<smem>>
    %c1_164 = arith.constant 1 : index
    %c0_165 = arith.constant 0 : index
    %c0_166 = arith.constant 0 : index
    %310 = vector.load %arg4[%c1_164, %c0_165, %c0_166] : memref<2x22x22xf32, #tpu.memory_space<vmem>>, vector<1x16x16xf32>
    %311 = vector.shape_cast %310 : vector<1x16x16xf32> to vector<16x16xf32>
    %312 = vector.broadcast %309 : f32 to vector<16x16xf32>
    %313 = arith.mulf %312, %311 : vector<16x16xf32>
    %314 = arith.addf %308, %313 : vector<16x16xf32>
    %c50 = arith.constant 50 : index
    %315 = memref.load %arg1[%c50] : memref<98xf32, #tpu.memory_space<smem>>
    %c1_167 = arith.constant 1 : index
    %c0_168 = arith.constant 0 : index
    %c1_169 = arith.constant 1 : index
    %316 = vector.load %arg4[%c1_167, %c0_168, %c1_169] : memref<2x22x22xf32, #tpu.memory_space<vmem>>, vector<1x16x16xf32>
    %317 = vector.shape_cast %316 : vector<1x16x16xf32> to vector<16x16xf32>
    %318 = vector.broadcast %315 : f32 to vector<16x16xf32>
    %319 = arith.mulf %318, %317 : vector<16x16xf32>
    %320 = arith.addf %314, %319 : vector<16x16xf32>
    %c51 = arith.constant 51 : index
    %321 = memref.load %arg1[%c51] : memref<98xf32, #tpu.memory_space<smem>>
    %c1_170 = arith.constant 1 : index
    %c0_171 = arith.constant 0 : index
    %c2_172 = arith.constant 2 : index
    %322 = vector.load %arg4[%c1_170, %c0_171, %c2_172] : memref<2x22x22xf32, #tpu.memory_space<vmem>>, vector<1x16x16xf32>
    %323 = vector.shape_cast %322 : vector<1x16x16xf32> to vector<16x16xf32>
    %324 = vector.broadcast %321 : f32 to vector<16x16xf32>
    %325 = arith.mulf %324, %323 : vector<16x16xf32>
    %326 = arith.addf %320, %325 : vector<16x16xf32>
    %c52 = arith.constant 52 : index
    %327 = memref.load %arg1[%c52] : memref<98xf32, #tpu.memory_space<smem>>
    %c1_173 = arith.constant 1 : index
    %c0_174 = arith.constant 0 : index
    %c3_175 = arith.constant 3 : index
    %328 = vector.load %arg4[%c1_173, %c0_174, %c3_175] : memref<2x22x22xf32, #tpu.memory_space<vmem>>, vector<1x16x16xf32>
    %329 = vector.shape_cast %328 : vector<1x16x16xf32> to vector<16x16xf32>
    %330 = vector.broadcast %327 : f32 to vector<16x16xf32>
    %331 = arith.mulf %330, %329 : vector<16x16xf32>
    %332 = arith.addf %326, %331 : vector<16x16xf32>
    %c53 = arith.constant 53 : index
    %333 = memref.load %arg1[%c53] : memref<98xf32, #tpu.memory_space<smem>>
    %c1_176 = arith.constant 1 : index
    %c0_177 = arith.constant 0 : index
    %c4_178 = arith.constant 4 : index
    %334 = vector.load %arg4[%c1_176, %c0_177, %c4_178] : memref<2x22x22xf32, #tpu.memory_space<vmem>>, vector<1x16x16xf32>
    %335 = vector.shape_cast %334 : vector<1x16x16xf32> to vector<16x16xf32>
    %336 = vector.broadcast %333 : f32 to vector<16x16xf32>
    %337 = arith.mulf %336, %335 : vector<16x16xf32>
    %338 = arith.addf %332, %337 : vector<16x16xf32>
    %c54 = arith.constant 54 : index
    %339 = memref.load %arg1[%c54] : memref<98xf32, #tpu.memory_space<smem>>
    %c1_179 = arith.constant 1 : index
    %c0_180 = arith.constant 0 : index
    %c5_181 = arith.constant 5 : index
    %340 = vector.load %arg4[%c1_179, %c0_180, %c5_181] : memref<2x22x22xf32, #tpu.memory_space<vmem>>, vector<1x16x16xf32>
    %341 = vector.shape_cast %340 : vector<1x16x16xf32> to vector<16x16xf32>
    %342 = vector.broadcast %339 : f32 to vector<16x16xf32>
    %343 = arith.mulf %342, %341 : vector<16x16xf32>
    %344 = arith.addf %338, %343 : vector<16x16xf32>
    %c55 = arith.constant 55 : index
    %345 = memref.load %arg1[%c55] : memref<98xf32, #tpu.memory_space<smem>>
    %c1_182 = arith.constant 1 : index
    %c0_183 = arith.constant 0 : index
    %c6_184 = arith.constant 6 : index
    %346 = vector.load %arg4[%c1_182, %c0_183, %c6_184] : memref<2x22x22xf32, #tpu.memory_space<vmem>>, vector<1x16x16xf32>
    %347 = vector.shape_cast %346 : vector<1x16x16xf32> to vector<16x16xf32>
    %348 = vector.broadcast %345 : f32 to vector<16x16xf32>
    %349 = arith.mulf %348, %347 : vector<16x16xf32>
    %350 = arith.addf %344, %349 : vector<16x16xf32>
    %c56 = arith.constant 56 : index
    %351 = memref.load %arg1[%c56] : memref<98xf32, #tpu.memory_space<smem>>
    %c1_185 = arith.constant 1 : index
    %c1_186 = arith.constant 1 : index
    %c0_187 = arith.constant 0 : index
    %352 = vector.load %arg4[%c1_185, %c1_186, %c0_187] : memref<2x22x22xf32, #tpu.memory_space<vmem>>, vector<1x16x16xf32>
    %353 = vector.shape_cast %352 : vector<1x16x16xf32> to vector<16x16xf32>
    %354 = vector.broadcast %351 : f32 to vector<16x16xf32>
    %355 = arith.mulf %354, %353 : vector<16x16xf32>
    %356 = arith.addf %350, %355 : vector<16x16xf32>
    %c57 = arith.constant 57 : index
    %357 = memref.load %arg1[%c57] : memref<98xf32, #tpu.memory_space<smem>>
    %c1_188 = arith.constant 1 : index
    %c1_189 = arith.constant 1 : index
    %c1_190 = arith.constant 1 : index
    %358 = vector.load %arg4[%c1_188, %c1_189, %c1_190] : memref<2x22x22xf32, #tpu.memory_space<vmem>>, vector<1x16x16xf32>
    %359 = vector.shape_cast %358 : vector<1x16x16xf32> to vector<16x16xf32>
    %360 = vector.broadcast %357 : f32 to vector<16x16xf32>
    %361 = arith.mulf %360, %359 : vector<16x16xf32>
    %362 = arith.addf %356, %361 : vector<16x16xf32>
    %c58 = arith.constant 58 : index
    %363 = memref.load %arg1[%c58] : memref<98xf32, #tpu.memory_space<smem>>
    %c1_191 = arith.constant 1 : index
    %c1_192 = arith.constant 1 : index
    %c2_193 = arith.constant 2 : index
    %364 = vector.load %arg4[%c1_191, %c1_192, %c2_193] : memref<2x22x22xf32, #tpu.memory_space<vmem>>, vector<1x16x16xf32>
    %365 = vector.shape_cast %364 : vector<1x16x16xf32> to vector<16x16xf32>
    %366 = vector.broadcast %363 : f32 to vector<16x16xf32>
    %367 = arith.mulf %366, %365 : vector<16x16xf32>
    %368 = arith.addf %362, %367 : vector<16x16xf32>
    %c59 = arith.constant 59 : index
    %369 = memref.load %arg1[%c59] : memref<98xf32, #tpu.memory_space<smem>>
    %c1_194 = arith.constant 1 : index
    %c1_195 = arith.constant 1 : index
    %c3_196 = arith.constant 3 : index
    %370 = vector.load %arg4[%c1_194, %c1_195, %c3_196] : memref<2x22x22xf32, #tpu.memory_space<vmem>>, vector<1x16x16xf32>
    %371 = vector.shape_cast %370 : vector<1x16x16xf32> to vector<16x16xf32>
    %372 = vector.broadcast %369 : f32 to vector<16x16xf32>
    %373 = arith.mulf %372, %371 : vector<16x16xf32>
    %374 = arith.addf %368, %373 : vector<16x16xf32>
    %c60 = arith.constant 60 : index
    %375 = memref.load %arg1[%c60] : memref<98xf32, #tpu.memory_space<smem>>
    %c1_197 = arith.constant 1 : index
    %c1_198 = arith.constant 1 : index
    %c4_199 = arith.constant 4 : index
    %376 = vector.load %arg4[%c1_197, %c1_198, %c4_199] : memref<2x22x22xf32, #tpu.memory_space<vmem>>, vector<1x16x16xf32>
    %377 = vector.shape_cast %376 : vector<1x16x16xf32> to vector<16x16xf32>
    %378 = vector.broadcast %375 : f32 to vector<16x16xf32>
    %379 = arith.mulf %378, %377 : vector<16x16xf32>
    %380 = arith.addf %374, %379 : vector<16x16xf32>
    %c61 = arith.constant 61 : index
    %381 = memref.load %arg1[%c61] : memref<98xf32, #tpu.memory_space<smem>>
    %c1_200 = arith.constant 1 : index
    %c1_201 = arith.constant 1 : index
    %c5_202 = arith.constant 5 : index
    %382 = vector.load %arg4[%c1_200, %c1_201, %c5_202] : memref<2x22x22xf32, #tpu.memory_space<vmem>>, vector<1x16x16xf32>
    %383 = vector.shape_cast %382 : vector<1x16x16xf32> to vector<16x16xf32>
    %384 = vector.broadcast %381 : f32 to vector<16x16xf32>
    %385 = arith.mulf %384, %383 : vector<16x16xf32>
    %386 = arith.addf %380, %385 : vector<16x16xf32>
    %c62 = arith.constant 62 : index
    %387 = memref.load %arg1[%c62] : memref<98xf32, #tpu.memory_space<smem>>
    %c1_203 = arith.constant 1 : index
    %c1_204 = arith.constant 1 : index
    %c6_205 = arith.constant 6 : index
    %388 = vector.load %arg4[%c1_203, %c1_204, %c6_205] : memref<2x22x22xf32, #tpu.memory_space<vmem>>, vector<1x16x16xf32>
    %389 = vector.shape_cast %388 : vector<1x16x16xf32> to vector<16x16xf32>
    %390 = vector.broadcast %387 : f32 to vector<16x16xf32>
    %391 = arith.mulf %390, %389 : vector<16x16xf32>
    %392 = arith.addf %386, %391 : vector<16x16xf32>
    %c63 = arith.constant 63 : index
    %393 = memref.load %arg1[%c63] : memref<98xf32, #tpu.memory_space<smem>>
    %c1_206 = arith.constant 1 : index
    %c2_207 = arith.constant 2 : index
    %c0_208 = arith.constant 0 : index
    %394 = vector.load %arg4[%c1_206, %c2_207, %c0_208] : memref<2x22x22xf32, #tpu.memory_space<vmem>>, vector<1x16x16xf32>
    %395 = vector.shape_cast %394 : vector<1x16x16xf32> to vector<16x16xf32>
    %396 = vector.broadcast %393 : f32 to vector<16x16xf32>
    %397 = arith.mulf %396, %395 : vector<16x16xf32>
    %398 = arith.addf %392, %397 : vector<16x16xf32>
    %c64 = arith.constant 64 : index
    %399 = memref.load %arg1[%c64] : memref<98xf32, #tpu.memory_space<smem>>
    %c1_209 = arith.constant 1 : index
    %c2_210 = arith.constant 2 : index
    %c1_211 = arith.constant 1 : index
    %400 = vector.load %arg4[%c1_209, %c2_210, %c1_211] : memref<2x22x22xf32, #tpu.memory_space<vmem>>, vector<1x16x16xf32>
    %401 = vector.shape_cast %400 : vector<1x16x16xf32> to vector<16x16xf32>
    %402 = vector.broadcast %399 : f32 to vector<16x16xf32>
    %403 = arith.mulf %402, %401 : vector<16x16xf32>
    %404 = arith.addf %398, %403 : vector<16x16xf32>
    %c65 = arith.constant 65 : index
    %405 = memref.load %arg1[%c65] : memref<98xf32, #tpu.memory_space<smem>>
    %c1_212 = arith.constant 1 : index
    %c2_213 = arith.constant 2 : index
    %c2_214 = arith.constant 2 : index
    %406 = vector.load %arg4[%c1_212, %c2_213, %c2_214] : memref<2x22x22xf32, #tpu.memory_space<vmem>>, vector<1x16x16xf32>
    %407 = vector.shape_cast %406 : vector<1x16x16xf32> to vector<16x16xf32>
    %408 = vector.broadcast %405 : f32 to vector<16x16xf32>
    %409 = arith.mulf %408, %407 : vector<16x16xf32>
    %410 = arith.addf %404, %409 : vector<16x16xf32>
    %c66 = arith.constant 66 : index
    %411 = memref.load %arg1[%c66] : memref<98xf32, #tpu.memory_space<smem>>
    %c1_215 = arith.constant 1 : index
    %c2_216 = arith.constant 2 : index
    %c3_217 = arith.constant 3 : index
    %412 = vector.load %arg4[%c1_215, %c2_216, %c3_217] : memref<2x22x22xf32, #tpu.memory_space<vmem>>, vector<1x16x16xf32>
    %413 = vector.shape_cast %412 : vector<1x16x16xf32> to vector<16x16xf32>
    %414 = vector.broadcast %411 : f32 to vector<16x16xf32>
    %415 = arith.mulf %414, %413 : vector<16x16xf32>
    %416 = arith.addf %410, %415 : vector<16x16xf32>
    %c67 = arith.constant 67 : index
    %417 = memref.load %arg1[%c67] : memref<98xf32, #tpu.memory_space<smem>>
    %c1_218 = arith.constant 1 : index
    %c2_219 = arith.constant 2 : index
    %c4_220 = arith.constant 4 : index
    %418 = vector.load %arg4[%c1_218, %c2_219, %c4_220] : memref<2x22x22xf32, #tpu.memory_space<vmem>>, vector<1x16x16xf32>
    %419 = vector.shape_cast %418 : vector<1x16x16xf32> to vector<16x16xf32>
    %420 = vector.broadcast %417 : f32 to vector<16x16xf32>
    %421 = arith.mulf %420, %419 : vector<16x16xf32>
    %422 = arith.addf %416, %421 : vector<16x16xf32>
    %c68 = arith.constant 68 : index
    %423 = memref.load %arg1[%c68] : memref<98xf32, #tpu.memory_space<smem>>
    %c1_221 = arith.constant 1 : index
    %c2_222 = arith.constant 2 : index
    %c5_223 = arith.constant 5 : index
    %424 = vector.load %arg4[%c1_221, %c2_222, %c5_223] : memref<2x22x22xf32, #tpu.memory_space<vmem>>, vector<1x16x16xf32>
    %425 = vector.shape_cast %424 : vector<1x16x16xf32> to vector<16x16xf32>
    %426 = vector.broadcast %423 : f32 to vector<16x16xf32>
    %427 = arith.mulf %426, %425 : vector<16x16xf32>
    %428 = arith.addf %422, %427 : vector<16x16xf32>
    %c69 = arith.constant 69 : index
    %429 = memref.load %arg1[%c69] : memref<98xf32, #tpu.memory_space<smem>>
    %c1_224 = arith.constant 1 : index
    %c2_225 = arith.constant 2 : index
    %c6_226 = arith.constant 6 : index
    %430 = vector.load %arg4[%c1_224, %c2_225, %c6_226] : memref<2x22x22xf32, #tpu.memory_space<vmem>>, vector<1x16x16xf32>
    %431 = vector.shape_cast %430 : vector<1x16x16xf32> to vector<16x16xf32>
    %432 = vector.broadcast %429 : f32 to vector<16x16xf32>
    %433 = arith.mulf %432, %431 : vector<16x16xf32>
    %434 = arith.addf %428, %433 : vector<16x16xf32>
    %c70 = arith.constant 70 : index
    %435 = memref.load %arg1[%c70] : memref<98xf32, #tpu.memory_space<smem>>
    %c1_227 = arith.constant 1 : index
    %c3_228 = arith.constant 3 : index
    %c0_229 = arith.constant 0 : index
    %436 = vector.load %arg4[%c1_227, %c3_228, %c0_229] : memref<2x22x22xf32, #tpu.memory_space<vmem>>, vector<1x16x16xf32>
    %437 = vector.shape_cast %436 : vector<1x16x16xf32> to vector<16x16xf32>
    %438 = vector.broadcast %435 : f32 to vector<16x16xf32>
    %439 = arith.mulf %438, %437 : vector<16x16xf32>
    %440 = arith.addf %434, %439 : vector<16x16xf32>
    %c71 = arith.constant 71 : index
    %441 = memref.load %arg1[%c71] : memref<98xf32, #tpu.memory_space<smem>>
    %c1_230 = arith.constant 1 : index
    %c3_231 = arith.constant 3 : index
    %c1_232 = arith.constant 1 : index
    %442 = vector.load %arg4[%c1_230, %c3_231, %c1_232] : memref<2x22x22xf32, #tpu.memory_space<vmem>>, vector<1x16x16xf32>
    %443 = vector.shape_cast %442 : vector<1x16x16xf32> to vector<16x16xf32>
    %444 = vector.broadcast %441 : f32 to vector<16x16xf32>
    %445 = arith.mulf %444, %443 : vector<16x16xf32>
    %446 = arith.addf %440, %445 : vector<16x16xf32>
    %c72 = arith.constant 72 : index
    %447 = memref.load %arg1[%c72] : memref<98xf32, #tpu.memory_space<smem>>
    %c1_233 = arith.constant 1 : index
    %c3_234 = arith.constant 3 : index
    %c2_235 = arith.constant 2 : index
    %448 = vector.load %arg4[%c1_233, %c3_234, %c2_235] : memref<2x22x22xf32, #tpu.memory_space<vmem>>, vector<1x16x16xf32>
    %449 = vector.shape_cast %448 : vector<1x16x16xf32> to vector<16x16xf32>
    %450 = vector.broadcast %447 : f32 to vector<16x16xf32>
    %451 = arith.mulf %450, %449 : vector<16x16xf32>
    %452 = arith.addf %446, %451 : vector<16x16xf32>
    %c73 = arith.constant 73 : index
    %453 = memref.load %arg1[%c73] : memref<98xf32, #tpu.memory_space<smem>>
    %c1_236 = arith.constant 1 : index
    %c3_237 = arith.constant 3 : index
    %c3_238 = arith.constant 3 : index
    %454 = vector.load %arg4[%c1_236, %c3_237, %c3_238] : memref<2x22x22xf32, #tpu.memory_space<vmem>>, vector<1x16x16xf32>
    %455 = vector.shape_cast %454 : vector<1x16x16xf32> to vector<16x16xf32>
    %456 = vector.broadcast %453 : f32 to vector<16x16xf32>
    %457 = arith.mulf %456, %455 : vector<16x16xf32>
    %458 = arith.addf %452, %457 : vector<16x16xf32>
    %c74 = arith.constant 74 : index
    %459 = memref.load %arg1[%c74] : memref<98xf32, #tpu.memory_space<smem>>
    %c1_239 = arith.constant 1 : index
    %c3_240 = arith.constant 3 : index
    %c4_241 = arith.constant 4 : index
    %460 = vector.load %arg4[%c1_239, %c3_240, %c4_241] : memref<2x22x22xf32, #tpu.memory_space<vmem>>, vector<1x16x16xf32>
    %461 = vector.shape_cast %460 : vector<1x16x16xf32> to vector<16x16xf32>
    %462 = vector.broadcast %459 : f32 to vector<16x16xf32>
    %463 = arith.mulf %462, %461 : vector<16x16xf32>
    %464 = arith.addf %458, %463 : vector<16x16xf32>
    %c75 = arith.constant 75 : index
    %465 = memref.load %arg1[%c75] : memref<98xf32, #tpu.memory_space<smem>>
    %c1_242 = arith.constant 1 : index
    %c3_243 = arith.constant 3 : index
    %c5_244 = arith.constant 5 : index
    %466 = vector.load %arg4[%c1_242, %c3_243, %c5_244] : memref<2x22x22xf32, #tpu.memory_space<vmem>>, vector<1x16x16xf32>
    %467 = vector.shape_cast %466 : vector<1x16x16xf32> to vector<16x16xf32>
    %468 = vector.broadcast %465 : f32 to vector<16x16xf32>
    %469 = arith.mulf %468, %467 : vector<16x16xf32>
    %470 = arith.addf %464, %469 : vector<16x16xf32>
    %c76 = arith.constant 76 : index
    %471 = memref.load %arg1[%c76] : memref<98xf32, #tpu.memory_space<smem>>
    %c1_245 = arith.constant 1 : index
    %c3_246 = arith.constant 3 : index
    %c6_247 = arith.constant 6 : index
    %472 = vector.load %arg4[%c1_245, %c3_246, %c6_247] : memref<2x22x22xf32, #tpu.memory_space<vmem>>, vector<1x16x16xf32>
    %473 = vector.shape_cast %472 : vector<1x16x16xf32> to vector<16x16xf32>
    %474 = vector.broadcast %471 : f32 to vector<16x16xf32>
    %475 = arith.mulf %474, %473 : vector<16x16xf32>
    %476 = arith.addf %470, %475 : vector<16x16xf32>
    %c77 = arith.constant 77 : index
    %477 = memref.load %arg1[%c77] : memref<98xf32, #tpu.memory_space<smem>>
    %c1_248 = arith.constant 1 : index
    %c4_249 = arith.constant 4 : index
    %c0_250 = arith.constant 0 : index
    %478 = vector.load %arg4[%c1_248, %c4_249, %c0_250] : memref<2x22x22xf32, #tpu.memory_space<vmem>>, vector<1x16x16xf32>
    %479 = vector.shape_cast %478 : vector<1x16x16xf32> to vector<16x16xf32>
    %480 = vector.broadcast %477 : f32 to vector<16x16xf32>
    %481 = arith.mulf %480, %479 : vector<16x16xf32>
    %482 = arith.addf %476, %481 : vector<16x16xf32>
    %c78 = arith.constant 78 : index
    %483 = memref.load %arg1[%c78] : memref<98xf32, #tpu.memory_space<smem>>
    %c1_251 = arith.constant 1 : index
    %c4_252 = arith.constant 4 : index
    %c1_253 = arith.constant 1 : index
    %484 = vector.load %arg4[%c1_251, %c4_252, %c1_253] : memref<2x22x22xf32, #tpu.memory_space<vmem>>, vector<1x16x16xf32>
    %485 = vector.shape_cast %484 : vector<1x16x16xf32> to vector<16x16xf32>
    %486 = vector.broadcast %483 : f32 to vector<16x16xf32>
    %487 = arith.mulf %486, %485 : vector<16x16xf32>
    %488 = arith.addf %482, %487 : vector<16x16xf32>
    %c79 = arith.constant 79 : index
    %489 = memref.load %arg1[%c79] : memref<98xf32, #tpu.memory_space<smem>>
    %c1_254 = arith.constant 1 : index
    %c4_255 = arith.constant 4 : index
    %c2_256 = arith.constant 2 : index
    %490 = vector.load %arg4[%c1_254, %c4_255, %c2_256] : memref<2x22x22xf32, #tpu.memory_space<vmem>>, vector<1x16x16xf32>
    %491 = vector.shape_cast %490 : vector<1x16x16xf32> to vector<16x16xf32>
    %492 = vector.broadcast %489 : f32 to vector<16x16xf32>
    %493 = arith.mulf %492, %491 : vector<16x16xf32>
    %494 = arith.addf %488, %493 : vector<16x16xf32>
    %c80 = arith.constant 80 : index
    %495 = memref.load %arg1[%c80] : memref<98xf32, #tpu.memory_space<smem>>
    %c1_257 = arith.constant 1 : index
    %c4_258 = arith.constant 4 : index
    %c3_259 = arith.constant 3 : index
    %496 = vector.load %arg4[%c1_257, %c4_258, %c3_259] : memref<2x22x22xf32, #tpu.memory_space<vmem>>, vector<1x16x16xf32>
    %497 = vector.shape_cast %496 : vector<1x16x16xf32> to vector<16x16xf32>
    %498 = vector.broadcast %495 : f32 to vector<16x16xf32>
    %499 = arith.mulf %498, %497 : vector<16x16xf32>
    %500 = arith.addf %494, %499 : vector<16x16xf32>
    %c81 = arith.constant 81 : index
    %501 = memref.load %arg1[%c81] : memref<98xf32, #tpu.memory_space<smem>>
    %c1_260 = arith.constant 1 : index
    %c4_261 = arith.constant 4 : index
    %c4_262 = arith.constant 4 : index
    %502 = vector.load %arg4[%c1_260, %c4_261, %c4_262] : memref<2x22x22xf32, #tpu.memory_space<vmem>>, vector<1x16x16xf32>
    %503 = vector.shape_cast %502 : vector<1x16x16xf32> to vector<16x16xf32>
    %504 = vector.broadcast %501 : f32 to vector<16x16xf32>
    %505 = arith.mulf %504, %503 : vector<16x16xf32>
    %506 = arith.addf %500, %505 : vector<16x16xf32>
    %c82 = arith.constant 82 : index
    %507 = memref.load %arg1[%c82] : memref<98xf32, #tpu.memory_space<smem>>
    %c1_263 = arith.constant 1 : index
    %c4_264 = arith.constant 4 : index
    %c5_265 = arith.constant 5 : index
    %508 = vector.load %arg4[%c1_263, %c4_264, %c5_265] : memref<2x22x22xf32, #tpu.memory_space<vmem>>, vector<1x16x16xf32>
    %509 = vector.shape_cast %508 : vector<1x16x16xf32> to vector<16x16xf32>
    %510 = vector.broadcast %507 : f32 to vector<16x16xf32>
    %511 = arith.mulf %510, %509 : vector<16x16xf32>
    %512 = arith.addf %506, %511 : vector<16x16xf32>
    %c83 = arith.constant 83 : index
    %513 = memref.load %arg1[%c83] : memref<98xf32, #tpu.memory_space<smem>>
    %c1_266 = arith.constant 1 : index
    %c4_267 = arith.constant 4 : index
    %c6_268 = arith.constant 6 : index
    %514 = vector.load %arg4[%c1_266, %c4_267, %c6_268] : memref<2x22x22xf32, #tpu.memory_space<vmem>>, vector<1x16x16xf32>
    %515 = vector.shape_cast %514 : vector<1x16x16xf32> to vector<16x16xf32>
    %516 = vector.broadcast %513 : f32 to vector<16x16xf32>
    %517 = arith.mulf %516, %515 : vector<16x16xf32>
    %518 = arith.addf %512, %517 : vector<16x16xf32>
    %c84 = arith.constant 84 : index
    %519 = memref.load %arg1[%c84] : memref<98xf32, #tpu.memory_space<smem>>
    %c1_269 = arith.constant 1 : index
    %c5_270 = arith.constant 5 : index
    %c0_271 = arith.constant 0 : index
    %520 = vector.load %arg4[%c1_269, %c5_270, %c0_271] : memref<2x22x22xf32, #tpu.memory_space<vmem>>, vector<1x16x16xf32>
    %521 = vector.shape_cast %520 : vector<1x16x16xf32> to vector<16x16xf32>
    %522 = vector.broadcast %519 : f32 to vector<16x16xf32>
    %523 = arith.mulf %522, %521 : vector<16x16xf32>
    %524 = arith.addf %518, %523 : vector<16x16xf32>
    %c85 = arith.constant 85 : index
    %525 = memref.load %arg1[%c85] : memref<98xf32, #tpu.memory_space<smem>>
    %c1_272 = arith.constant 1 : index
    %c5_273 = arith.constant 5 : index
    %c1_274 = arith.constant 1 : index
    %526 = vector.load %arg4[%c1_272, %c5_273, %c1_274] : memref<2x22x22xf32, #tpu.memory_space<vmem>>, vector<1x16x16xf32>
    %527 = vector.shape_cast %526 : vector<1x16x16xf32> to vector<16x16xf32>
    %528 = vector.broadcast %525 : f32 to vector<16x16xf32>
    %529 = arith.mulf %528, %527 : vector<16x16xf32>
    %530 = arith.addf %524, %529 : vector<16x16xf32>
    %c86 = arith.constant 86 : index
    %531 = memref.load %arg1[%c86] : memref<98xf32, #tpu.memory_space<smem>>
    %c1_275 = arith.constant 1 : index
    %c5_276 = arith.constant 5 : index
    %c2_277 = arith.constant 2 : index
    %532 = vector.load %arg4[%c1_275, %c5_276, %c2_277] : memref<2x22x22xf32, #tpu.memory_space<vmem>>, vector<1x16x16xf32>
    %533 = vector.shape_cast %532 : vector<1x16x16xf32> to vector<16x16xf32>
    %534 = vector.broadcast %531 : f32 to vector<16x16xf32>
    %535 = arith.mulf %534, %533 : vector<16x16xf32>
    %536 = arith.addf %530, %535 : vector<16x16xf32>
    %c87 = arith.constant 87 : index
    %537 = memref.load %arg1[%c87] : memref<98xf32, #tpu.memory_space<smem>>
    %c1_278 = arith.constant 1 : index
    %c5_279 = arith.constant 5 : index
    %c3_280 = arith.constant 3 : index
    %538 = vector.load %arg4[%c1_278, %c5_279, %c3_280] : memref<2x22x22xf32, #tpu.memory_space<vmem>>, vector<1x16x16xf32>
    %539 = vector.shape_cast %538 : vector<1x16x16xf32> to vector<16x16xf32>
    %540 = vector.broadcast %537 : f32 to vector<16x16xf32>
    %541 = arith.mulf %540, %539 : vector<16x16xf32>
    %542 = arith.addf %536, %541 : vector<16x16xf32>
    %c88 = arith.constant 88 : index
    %543 = memref.load %arg1[%c88] : memref<98xf32, #tpu.memory_space<smem>>
    %c1_281 = arith.constant 1 : index
    %c5_282 = arith.constant 5 : index
    %c4_283 = arith.constant 4 : index
    %544 = vector.load %arg4[%c1_281, %c5_282, %c4_283] : memref<2x22x22xf32, #tpu.memory_space<vmem>>, vector<1x16x16xf32>
    %545 = vector.shape_cast %544 : vector<1x16x16xf32> to vector<16x16xf32>
    %546 = vector.broadcast %543 : f32 to vector<16x16xf32>
    %547 = arith.mulf %546, %545 : vector<16x16xf32>
    %548 = arith.addf %542, %547 : vector<16x16xf32>
    %c89 = arith.constant 89 : index
    %549 = memref.load %arg1[%c89] : memref<98xf32, #tpu.memory_space<smem>>
    %c1_284 = arith.constant 1 : index
    %c5_285 = arith.constant 5 : index
    %c5_286 = arith.constant 5 : index
    %550 = vector.load %arg4[%c1_284, %c5_285, %c5_286] : memref<2x22x22xf32, #tpu.memory_space<vmem>>, vector<1x16x16xf32>
    %551 = vector.shape_cast %550 : vector<1x16x16xf32> to vector<16x16xf32>
    %552 = vector.broadcast %549 : f32 to vector<16x16xf32>
    %553 = arith.mulf %552, %551 : vector<16x16xf32>
    %554 = arith.addf %548, %553 : vector<16x16xf32>
    %c90 = arith.constant 90 : index
    %555 = memref.load %arg1[%c90] : memref<98xf32, #tpu.memory_space<smem>>
    %c1_287 = arith.constant 1 : index
    %c5_288 = arith.constant 5 : index
    %c6_289 = arith.constant 6 : index
    %556 = vector.load %arg4[%c1_287, %c5_288, %c6_289] : memref<2x22x22xf32, #tpu.memory_space<vmem>>, vector<1x16x16xf32>
    %557 = vector.shape_cast %556 : vector<1x16x16xf32> to vector<16x16xf32>
    %558 = vector.broadcast %555 : f32 to vector<16x16xf32>
    %559 = arith.mulf %558, %557 : vector<16x16xf32>
    %560 = arith.addf %554, %559 : vector<16x16xf32>
    %c91 = arith.constant 91 : index
    %561 = memref.load %arg1[%c91] : memref<98xf32, #tpu.memory_space<smem>>
    %c1_290 = arith.constant 1 : index
    %c6_291 = arith.constant 6 : index
    %c0_292 = arith.constant 0 : index
    %562 = vector.load %arg4[%c1_290, %c6_291, %c0_292] : memref<2x22x22xf32, #tpu.memory_space<vmem>>, vector<1x16x16xf32>
    %563 = vector.shape_cast %562 : vector<1x16x16xf32> to vector<16x16xf32>
    %564 = vector.broadcast %561 : f32 to vector<16x16xf32>
    %565 = arith.mulf %564, %563 : vector<16x16xf32>
    %566 = arith.addf %560, %565 : vector<16x16xf32>
    %c92 = arith.constant 92 : index
    %567 = memref.load %arg1[%c92] : memref<98xf32, #tpu.memory_space<smem>>
    %c1_293 = arith.constant 1 : index
    %c6_294 = arith.constant 6 : index
    %c1_295 = arith.constant 1 : index
    %568 = vector.load %arg4[%c1_293, %c6_294, %c1_295] : memref<2x22x22xf32, #tpu.memory_space<vmem>>, vector<1x16x16xf32>
    %569 = vector.shape_cast %568 : vector<1x16x16xf32> to vector<16x16xf32>
    %570 = vector.broadcast %567 : f32 to vector<16x16xf32>
    %571 = arith.mulf %570, %569 : vector<16x16xf32>
    %572 = arith.addf %566, %571 : vector<16x16xf32>
    %c93 = arith.constant 93 : index
    %573 = memref.load %arg1[%c93] : memref<98xf32, #tpu.memory_space<smem>>
    %c1_296 = arith.constant 1 : index
    %c6_297 = arith.constant 6 : index
    %c2_298 = arith.constant 2 : index
    %574 = vector.load %arg4[%c1_296, %c6_297, %c2_298] : memref<2x22x22xf32, #tpu.memory_space<vmem>>, vector<1x16x16xf32>
    %575 = vector.shape_cast %574 : vector<1x16x16xf32> to vector<16x16xf32>
    %576 = vector.broadcast %573 : f32 to vector<16x16xf32>
    %577 = arith.mulf %576, %575 : vector<16x16xf32>
    %578 = arith.addf %572, %577 : vector<16x16xf32>
    %c94 = arith.constant 94 : index
    %579 = memref.load %arg1[%c94] : memref<98xf32, #tpu.memory_space<smem>>
    %c1_299 = arith.constant 1 : index
    %c6_300 = arith.constant 6 : index
    %c3_301 = arith.constant 3 : index
    %580 = vector.load %arg4[%c1_299, %c6_300, %c3_301] : memref<2x22x22xf32, #tpu.memory_space<vmem>>, vector<1x16x16xf32>
    %581 = vector.shape_cast %580 : vector<1x16x16xf32> to vector<16x16xf32>
    %582 = vector.broadcast %579 : f32 to vector<16x16xf32>
    %583 = arith.mulf %582, %581 : vector<16x16xf32>
    %584 = arith.addf %578, %583 : vector<16x16xf32>
    %c95 = arith.constant 95 : index
    %585 = memref.load %arg1[%c95] : memref<98xf32, #tpu.memory_space<smem>>
    %c1_302 = arith.constant 1 : index
    %c6_303 = arith.constant 6 : index
    %c4_304 = arith.constant 4 : index
    %586 = vector.load %arg4[%c1_302, %c6_303, %c4_304] : memref<2x22x22xf32, #tpu.memory_space<vmem>>, vector<1x16x16xf32>
    %587 = vector.shape_cast %586 : vector<1x16x16xf32> to vector<16x16xf32>
    %588 = vector.broadcast %585 : f32 to vector<16x16xf32>
    %589 = arith.mulf %588, %587 : vector<16x16xf32>
    %590 = arith.addf %584, %589 : vector<16x16xf32>
    %c96 = arith.constant 96 : index
    %591 = memref.load %arg1[%c96] : memref<98xf32, #tpu.memory_space<smem>>
    %c1_305 = arith.constant 1 : index
    %c6_306 = arith.constant 6 : index
    %c5_307 = arith.constant 5 : index
    %592 = vector.load %arg4[%c1_305, %c6_306, %c5_307] : memref<2x22x22xf32, #tpu.memory_space<vmem>>, vector<1x16x16xf32>
    %593 = vector.shape_cast %592 : vector<1x16x16xf32> to vector<16x16xf32>
    %594 = vector.broadcast %591 : f32 to vector<16x16xf32>
    %595 = arith.mulf %594, %593 : vector<16x16xf32>
    %596 = arith.addf %590, %595 : vector<16x16xf32>
    %c97 = arith.constant 97 : index
    %597 = memref.load %arg1[%c97] : memref<98xf32, #tpu.memory_space<smem>>
    %c1_308 = arith.constant 1 : index
    %c6_309 = arith.constant 6 : index
    %c6_310 = arith.constant 6 : index
    %598 = vector.load %arg4[%c1_308, %c6_309, %c6_310] : memref<2x22x22xf32, #tpu.memory_space<vmem>>, vector<1x16x16xf32>
    %599 = vector.shape_cast %598 : vector<1x16x16xf32> to vector<16x16xf32>
    %600 = vector.broadcast %597 : f32 to vector<16x16xf32>
    %601 = arith.mulf %600, %599 : vector<16x16xf32>
    %602 = arith.addf %596, %601 : vector<16x16xf32>
    %cst_311 = arith.constant 0.000000e+00 : f32
    %603 = vector.broadcast %cst_311 : f32 to vector<16x16xf32>
    %604 = arith.subf %603, %602 : vector<16x16xf32>
    %605 = math.exp %604 : vector<16x16xf32>
    %cst_312 = arith.constant 1.000000e+00 : f32
    %606 = vector.broadcast %cst_312 : f32 to vector<16x16xf32>
    %607 = arith.addf %606, %605 : vector<16x16xf32>
    %cst_313 = arith.constant 1.000000e+00 : f32
    %608 = vector.broadcast %cst_313 : f32 to vector<16x16xf32>
    %609 = arith.divf %608, %607 : vector<16x16xf32>
    %c0_314 = arith.constant 0 : index
    %c0_315 = arith.constant 0 : index
    %c0_316 = arith.constant 0 : index
    %c0_317 = arith.constant 0 : index
    %610 = vector.load %arg3[%c0_314, %c0_315, %c0_316, %c0_317] : memref<1x1x16x16xf32, #tpu.memory_space<vmem>>, vector<1x1x16x16xf32>
    %611 = vector.shape_cast %610 : vector<1x1x16x16xf32> to vector<16x16xf32>
    %612 = vector.shape_cast %609 : vector<16x16xf32> to vector<1x1x16x16xf32>
    tpu.vector_store %arg3[%c0_314, %c0_315, %c0_316, %c0_317], %612 {strides = array<i32>} : memref<1x1x16x16xf32, #tpu.memory_space<vmem>>, vector<1x1x16x16xf32>,
    return
  }
  func.func @transform_0(%arg0: i32) -> i32 {
    %c0_i32 = arith.constant 0 : i32
    %c0_i32_0 = arith.constant 0 : i32
    return %c0_i32 : i32
  }
  func.func @transform_1(%arg0: i32) -> (i32, i32, i32, i32) {
    %c0_i32 = arith.constant 0 : i32
    %c0_i32_0 = arith.constant 0 : i32
    %c0_i32_1 = arith.constant 0 : i32
    %c0_i32_2 = arith.constant 0 : i32
    return %arg0, %c0_i32, %c0_i32_0, %c0_i32_1 : i32, i32, i32, i32
  }
  func.func @transform_2(%arg0: i32) -> (i32, i32, i32, i32) {
    %c0_i32 = arith.constant 0 : i32
    %c0_i32_0 = arith.constant 0 : i32
    %c0_i32_1 = arith.constant 0 : i32
    %c0_i32_2 = arith.constant 0 : i32
    return %arg0, %c0_i32, %c0_i32_0, %c0_i32_1 : i32, i32, i32, i32
  }
}

</mosaic_0001>

<llo_original>
// kernel: tpu_custom_call.1
$region0: #{tpu_custom_call.1}
  #allocation0 [shape = 'u32[]', space=smem, size = 0x4, offset = 0x4, fixed_abs, tag = 'smem constant byte address 0x4 - core index']
  #allocation1 [shape = 'u32[144,128]{1,0:T(1,128)}', space=vmem, size = 0x12000, scoped, tag = 'internal scratch']
  #allocation2 [shape = 'f32[2,22,22]{2,1,0:T(8,128)}', space=vmem, size = 0x6000, scoped, tag = 'scratch operand']
  %s0 = inlined_call_operand.hbm [shape: f32[98], index: 0, kind: input, shape index: {}]
  %s1 = inlined_call_operand.hbm [shape: f32[2,4,16,16], index: 1, kind: input, shape index: {}]
  %s2 = inlined_call_operand.hbm [shape: f32[2,1,16,16], index: 2, kind: output, shape index: {}]
  %s3 = sld [smem:[#allocation0]]
  $region49: #{tpu_custom_call.1} parent=0
    _
  %s5 = ssub.s32 1, %s3
  %s6 = scalar_select 0, %s5, %s3
  $region1: #{tpu_custom_call.1} parent=0
    #allocation3 [shape = 'u8[512]{0}', space=smem, size = 0x200, scoped, tag = 'input window, operand 0, single buffered']
    #allocation4 [shape = 's32[2]{0}', space=sflag, size = 0x8, scoped, tag = 'scoped memory for tpu_custom_call.1']
    #allocation5 [shape = 's32[2]{0}', space=sflag, size = 0x8, scoped, tag = 'scoped memory for tpu_custom_call.1']
    #allocation6 [shape = 's32[2]{0}', space=sflag, size = 0x8, scoped, tag = 'scoped memory for tpu_custom_call.1']
    #allocation7 [shape = 'u8[65536]{0}', space=vmem, size = 0x10000, scoped, tag = 'input window, operand 1']
    #allocation8 [shape = 'u8[16384]{0}', space=vmem, size = 0x4000, scoped, tag = 'output window, operand 0']
    %7 = vsyncpa [#allocation6], 0
    %8 = vsyncpa [#allocation4], 0
    %s9 = scalar_lea.sflag [#allocation4], 1
    %10 = vsyncpa %s9, 0
    %11 = vsyncpa [#allocation5], 0
    %s12 = scalar_lea.sflag [#allocation5], 1
    %13 = vsyncpa %s12, 0
    loop: start=0, step=1, limit=4
    $region2: #{tpu_custom_call.1} parent=1 // loop_pre_header
      _
    $region3: #{tpu_custom_call.1} parent=1 // loop_header
      %s15 = sphi 0, %s19
      %p16 = scmp.ge.s32.totalorder %s15, 4
      %s23 = sphi 0, %s23
      %s25 = sphi 0, %s23
      %s26 = sphi 0, %s25
      %s40 = sphi 0, %s26
      %s46 = sphi 0, %s48
      %s49 = sphi 0, %s46
      %s50 = sphi 0, %s49
      %s66 = sphi 0, %s50
      %s72 = sphi 0, %s74
      %s75 = sphi 0, %s72
      %s76 = sphi 0, %s75
      %s92 = sphi 0, %s76
    $region4: #{tpu_custom_call.1} parent=1 // loop_header_branch
      %18 = sbr.rel (%p16) target = $region8
    $region5: #{tpu_custom_call.1} parent=1 // loop_body
      %s20 = ssub.s32 %s15, 1
      %s21 = ssub.s32 %s15, 2
      %s22 = sadd.s32 %s15, 1
      %s24 = sadd.s32 %s23, 1
      %p27 = scmp.eq.s32.totalorder %s15, 1
      %p28 = scmp.ne.s32.totalorder %s23, %s25
      %p29 = scmp.eq.s32.totalorder %s15, 0
      %p30 = por %p28, %p29
      %p31 = scmp.ne.s32.totalorder %s23, %s25
      %p32 = scmp.eq.s32.totalorder %s20, 1
      %p33 = por %p31, %p32
      %p34 = scmp.ne.s32.totalorder %s25, %s26
      %p35 = scmp.eq.s32.totalorder %s20, 0
      %p36 = por %p34, %p35
      %p37 = scmp.ne.s32.totalorder %s25, %s26
      %p38 = scmp.eq.s32.totalorder %s21, 1
      %p39 = por %p37, %p38
      %p41 = scmp.ne.s32.totalorder %s26, %s40
      %p42 = scmp.eq.s32.totalorder %s21, 0
      %p43 = por %p41, %p42
      %s44 = ssub.s32 %s15, %s22
      %p45 = scmp.eq.s32.totalorder %s44, 0
      %s47 = sadd.s32 %s46, 1
      %s48 = scalar_select %p45, %s46, %s47
      %p51 = pneg %p45
      %p52 = scmp.eq.s32.totalorder %s15, 1
      %p53 = por %p51, %p52
      %p54 = scmp.ne.s32.totalorder %s46, %s49
      %p55 = scmp.eq.s32.totalorder %s15, 0
      %p56 = por %p54, %p55
      %p57 = scmp.ne.s32.totalorder %s46, %s49
      %p58 = scmp.eq.s32.totalorder %s20, 1
      %p59 = por %p57, %p58
      %p60 = scmp.ne.s32.totalorder %s49, %s50
      %p61 = scmp.eq.s32.totalorder %s20, 0
      %p62 = por %p60, %p61
      %p63 = scmp.ne.s32.totalorder %s49, %s50
      %p64 = scmp.eq.s32.totalorder %s21, 1
      %p65 = por %p63, %p64
      %p67 = scmp.ne.s32.totalorder %s50, %s66
      %p68 = scmp.eq.s32.totalorder %s21, 0
      %p69 = por %p67, %p68
      %s70 = ssub.s32 %s15, %s22
      %p71 = scmp.eq.s32.totalorder %s70, 0
      %s73 = sadd.s32 %s72, 1
      %s74 = scalar_select %p71, %s72, %s73
      %p77 = pneg %p71
      %p78 = scmp.eq.s32.totalorder %s15, 1
      %p79 = por %p77, %p78
      %p80 = scmp.ne.s32.totalorder %s72, %s75
      %p81 = scmp.eq.s32.totalorder %s15, 0
      %p82 = por %p80, %p81
      %p83 = scmp.ne.s32.totalorder %s72, %s75
      %p84 = scmp.eq.s32.totalorder %s20, 1
      %p85 = por %p83, %p84
      %p86 = scmp.ne.s32.totalorder %s75, %s76
      %p87 = scmp.eq.s32.totalorder %s20, 0
      %p88 = por %p86, %p87
      %p89 = scmp.ne.s32.totalorder %s75, %s76
      %p90 = scmp.eq.s32.totalorder %s21, 1
      %p91 = por %p89, %p90
      %p93 = scmp.ne.s32.totalorder %s76, %s92
      %p94 = scmp.eq.s32.totalorder %s21, 0
      %p95 = por %p93, %p94
      %p96 = scmp.le.s32.totalorder 1, %s15
      %p97 = scmp.lt.s32.totalorder %s15, 3
      %p98 = pnand %p96, %p97
      %p99 = pneg %p98
      // Predicated region
      $region9: #{tpu_custom_call.1} parent=5 // pred_check
        _
      $region10: #{tpu_custom_call.1} parent=5 // pred_check_branch
        %101 = sbr.rel (%p98) target = $region12
      $region11: #{tpu_custom_call.1} parent=5 // pred_region
        %s102 = ssub.s32 %s15, 1
        // Predicated region
        $region13: #{tpu_custom_call.1} parent=11 // pred_check
          %p103 = pneg %p36
        $region14: #{tpu_custom_call.1} parent=11 // pred_check_branch
          %105 = sbr.rel (%p103) target = $region16
        $region15: #{tpu_custom_call.1} parent=11 // pred_region
          %s107 = ssub.s32 16, 16
          %108 = vsyncadd [#allocation6], %s107
          %111 = dma.hbm_to_smem %s0, 16, [#allocation3], [#allocation6]
        $region16: #{tpu_custom_call.1} parent=11 // pred_fallthru
          _
      $region12: #{tpu_custom_call.1} parent=5 // pred_fallthru
        _
      %p112 = scmp.lt.s32.totalorder %s15, 2
      // Predicated region
      $region17: #{tpu_custom_call.1} parent=5 // pred_check
        %p113 = pneg %p112
      $region18: #{tpu_custom_call.1} parent=5 // pred_check_branch
        %115 = sbr.rel (%p113) target = $region20
      $region19: #{tpu_custom_call.1} parent=5 // pred_region
        // Predicated region
        $region21: #{tpu_custom_call.1} parent=19 // pred_check
          %p116 = pneg %p56
        $region22: #{tpu_custom_call.1} parent=19 // pred_check_branch
          %118 = sbr.rel (%p116) target = $region24
        $region23: #{tpu_custom_call.1} parent=19 // pred_region
          %s119 = sand.u32 %s46, 1
          %s120 = scalar_lea.sflag [#allocation4], %s119
          %s121 = sand.u32 %s46, 1
          %s122 = smul.addr %s121, 64
          %s123 = scalar_lea.vmem [#allocation7], %s122
          %s125 = ssub.s32 1024, 1024
          %126 = vsyncadd %s120, %s125
          %s127 = smul.addr %s15, 8
          %s128 = smul.addr %s127, 128
          %s129 = scalar_lea.hbm %s1, %s128
          %s130 = sshll.u32 %s123, 4
          %s131 = int_to_ptr.vmem [resolvable:$true] %s130
          %136 = dma.hbm_to_vmem [thread:$0]  %s129, 1024, %s131, %s120, 128, 128, 8
        $region24: #{tpu_custom_call.1} parent=19 // pred_fallthru
          _
      $region20: #{tpu_custom_call.1} parent=5 // pred_fallthru
        _
      %p137 = scmp.le.s32.totalorder 1, %s15
      %p138 = scmp.lt.s32.totalorder %s15, 3
      %p139 = pnand %p137, %p138
      %p140 = pneg %p139
      // Predicated region
      $region25: #{tpu_custom_call.1} parent=5 // pred_check
        _
      $region26: #{tpu_custom_call.1} parent=5 // pred_check_branch
        %142 = sbr.rel (%p139) target = $region28
      $region27: #{tpu_custom_call.1} parent=5 // pred_region
        %s143 = ssub.s32 %s15, 1
        // Predicated region
        $region29: #{tpu_custom_call.1} parent=27 // pred_check
          %p144 = pneg %p36
        $region30: #{tpu_custom_call.1} parent=27 // pred_check_branch
          %146 = sbr.rel (%p144) target = $region32
        $region31: #{tpu_custom_call.1} parent=27 // pred_region
          %147 = dma.done [#allocation6], 16
        $region32: #{tpu_custom_call.1} parent=27 // pred_fallthru
          _
        %s148 = sand.u32 %s49, 1
        %s149 = scalar_lea.sflag [#allocation4], %s148
        %s150 = sand.u32 %s49, 1
        %s151 = smul.addr %s150, 64
        %s152 = scalar_lea.vmem [#allocation7], %s151
        // Predicated region
        $region33: #{tpu_custom_call.1} parent=27 // pred_check
          %p153 = pneg %p62
        $region34: #{tpu_custom_call.1} parent=27 // pred_check_branch
          %155 = sbr.rel (%p153) target = $region36
        $region35: #{tpu_custom_call.1} parent=27 // pred_region
          %156 = dma.done %s149, 1024
        $region36: #{tpu_custom_call.1} parent=27 // pred_fallthru
          _
        %157 = sfence
        %p158 = pneg %p36
        %p159 = pneg %p33
        %s160 = sand.u32 %s49, 1
        %s161 = scalar_lea.sflag [#allocation4], %s160
        %s162 = sand.u32 %s49, 1
        %s163 = smul.addr %s162, 64
        %s164 = scalar_lea.vmem [#allocation7], %s163
        %p165 = pneg %p62
        %p166 = pneg %p59
        %p167 = pneg %p88
        %p168 = pneg %p85
        %s169 = sand.u32 %s75, 1
        %s170 = scalar_lea.sflag [#allocation5], %s169
        %s171 = sand.u32 %s75, 1
        %s172 = smul.addr %s171, 16
        %s173 = scalar_lea.vmem [#allocation8], %s172
        %v174 = vld [vmem:[%s152] sm:$0xff]
        %v175 = vld [vmem:[%s152 + $0x8] sm:$0xff]
        %v176 = vld [vmem:[%s152 + $0x10] sm:$0xff]
        %v177 = vld [vmem:[%s152 + $0x18] sm:$0xff]
        %v178 = vld [vmem:[%s152 + $0x20] sm:$0xff]
        %v179 = vld [vmem:[%s152 + $0x28] sm:$0xff]
        %v180 = vld [vmem:[%s152 + $0x30] sm:$0xff]
        %v181 = vld [vmem:[%s152 + $0x38] sm:$0xff]
        %vm182 = vcmask 130048
        %v183 = vsel %vm182, %v174, 0.0
        %v184 = vsel %vm182, %v176, 0.0
        %v185 = vadd.f32 %v183, %v184
        %v186 = vsel %vm182, %v178, 0.0
        %v187 = vadd.f32 %v185, %v186
        %v188 = vsel %vm182, %v180, 0.0
        %v189 = vadd.f32 %v187, %v188
        %v190 = vsel %vm182, %v175, 0.0
        %v191 = vsel %vm182, %v177, 0.0
        %v192 = vadd.f32 %v190, %v191
        %v193 = vsel %vm182, %v179, 0.0
        %v194 = vadd.f32 %v192, %v193
        %v195 = vsel %vm182, %v181, 0.0
        %v196 = vadd.f32 %v194, %v195
        %v197 = vrcp.pop 4.0
        %v198 = vmul.f32 %v189, %v197
        %v199 = vmul.f32 %v196, %v197
        %v200 = vsel %vm182, %v174, -inf
        %v201 = vsel %vm182, %v176, -inf
        %v202 = vsel %vm182, %v178, -inf
        %v203 = vmax.f32 %v200, %v202
        %v204 = vsel %vm182, %v180, -inf
        %v205 = vmax.f32 %v201, %v204
        %v206 = vmax.f32 %v203, %v205
        %v207 = vsel %vm182, %v175, -inf
        %v208 = vsel %vm182, %v177, -inf
        %v209 = vsel %vm182, %v179, -inf
        %v210 = vmax.f32 %v207, %v209
        %v211 = vsel %vm182, %v181, -inf
        %v212 = vmax.f32 %v208, %v211
        %v213 = vmax.f32 %v210, %v212
        %vm214 = vcmask 179200
        %215 = vst.msk [vmem:[#allocation2] sm:$0xff] %vm214, 0.0
        %216 = vst.msk [vmem:[#allocation2 + $0x8] sm:$0xff] %vm214, 0.0
        %vm217 = vcmask 177152
        %218 = vst.msk [vmem:[#allocation2 + $0x10] sm:$0x3f] %vm217, 0.0
        %219 = vst.msk [vmem:[#allocation2 + $0x18] sm:$0xff] %vm214, 0.0
        %220 = vst.msk [vmem:[#allocation2 + $0x20] sm:$0xff] %vm214, 0.0
        %221 = vst.msk [vmem:[#allocation2 + $0x28] sm:$0x3f] %vm217, 0.0
        %224 = vrot.lane.b32.xlu0 %v198, 3
        %v225 = vpop.permute.xlu0 %224
        %226 = vrot.lane.b32.xlu0 %v199, 3
        %v227 = vpop.permute.xlu0 %226
        %vm230 = vcmask 154648
        %231 = vst.msk [vmem:[#allocation2 + $0x3] sm:$0xff] %vm230, %v225
        %232 = vst.msk [vmem:[#allocation2 + $0xb] sm:$0xff] %vm230, %v227
        %235 = vrot.lane.b32.xlu0 %v206, 3
        %v236 = vpop.permute.xlu0 %235
        %237 = vrot.lane.b32.xlu0 %v213, 3
        %v238 = vpop.permute.xlu0 %237
        %s241 = scalar_lea.vmem [#allocation2], 24
        %242 = vst.msk [vmem:[%s241 + $0x3] sm:$0xff] %vm230, %v236
        %243 = vst.msk [vmem:[%s241 + $0xb] sm:$0xff] %vm230, %v238
        %s244 = sld [smem:[#allocation3]]
        %v245 = vld [vmem:[#allocation2] sm:$0xff]
        %v246 = vld [vmem:[#allocation2 + $0x8] sm:$0xff]
        %v247 = vstv %s244
        %v248 = vmul.f32 %v247, %v245
        %v249 = vmul.f32 %v247, %v246
        %v250 = vadd.f32 %v248, 0.0
        %v251 = vadd.f32 %v249, 0.0
        %s252 = sld [smem:[#allocation3 + $0x1]]
        %v253 = vstv %s252
        %v254 = vmul.f32 %v253, %v245
        %v255 = vmul.f32 %v253, %v246
        %258 = vrot.lane.b32.xlu0 %v254, 127
        %v259 = vpop.permute.xlu0 %258
        %260 = vrot.lane.b32.xlu0 %v255, 127
        %v261 = vpop.permute.xlu0 %260
        %v264 = vadd.f32 %v250, %v259
        %v265 = vadd.f32 %v251, %v261
        %s266 = sld [smem:[#allocation3 + $0x2]]
        %v267 = vstv %s266
        %v268 = vmul.f32 %v267, %v245
        %v269 = vmul.f32 %v267, %v246
        %272 = vrot.lane.b32.xlu0 %v268, 126
        %v273 = vpop.permute.xlu0 %272
        %274 = vrot.lane.b32.xlu0 %v269, 126
        %v275 = vpop.permute.xlu0 %274
        %v278 = vadd.f32 %v264, %v273
        %v279 = vadd.f32 %v265, %v275
        %s280 = sld [smem:[#allocation3 + $0x3]]
        %v281 = vstv %s280
        %v282 = vmul.f32 %v281, %v245
        %v283 = vmul.f32 %v281, %v246
        %286 = vrot.lane.b32.xlu0 %v282, 125
        %v287 = vpop.permute.xlu0 %286
        %288 = vrot.lane.b32.xlu0 %v283, 125
        %v289 = vpop.permute.xlu0 %288
        %v292 = vadd.f32 %v278, %v287
        %v293 = vadd.f32 %v279, %v289
        %s294 = sld [smem:[#allocation3 + $0x4]]
        %v295 = vstv %s294
        %v296 = vmul.f32 %v295, %v245
        %v297 = vmul.f32 %v295, %v246
        %300 = vrot.lane.b32.xlu0 %v296, 124
        %v301 = vpop.permute.xlu0 %300
        %302 = vrot.lane.b32.xlu0 %v297, 124
        %v303 = vpop.permute.xlu0 %302
        %v306 = vadd.f32 %v292, %v301
        %v307 = vadd.f32 %v293, %v303
        %s308 = sld [smem:[#allocation3 + $0x5]]
        %v309 = vstv %s308
        %v310 = vmul.f32 %v309, %v245
        %v311 = vmul.f32 %v309, %v246
        %314 = vrot.lane.b32.xlu0 %v310, 123
        %v315 = vpop.permute.xlu0 %314
        %316 = vrot.lane.b32.xlu0 %v311, 123
        %v317 = vpop.permute.xlu0 %316
        %v320 = vadd.f32 %v306, %v315
        %v321 = vadd.f32 %v307, %v317
        %s322 = sld [smem:[#allocation3 + $0x6]]
        %v323 = vstv %s322
        %v324 = vmul.f32 %v323, %v245
        %v325 = vmul.f32 %v323, %v246
        %328 = vrot.lane.b32.xlu0 %v324, 122
        %v329 = vpop.permute.xlu0 %328
        %330 = vrot.lane.b32.xlu0 %v325, 122
        %v331 = vpop.permute.xlu0 %330
        %v334 = vadd.f32 %v320, %v329
        %v335 = vadd.f32 %v321, %v331
        %s336 = sld [smem:[#allocation3 + $0x7]]
        %v337 = vld [vmem:[#allocation2 + $0x1] sm:$0xff]
        %v338 = vld [vmem:[#allocation2 + $0x9] sm:$0xff]
        %v339 = vstv %s336
        %v340 = vmul.f32 %v339, %v337
        %v341 = vmul.f32 %v339, %v338
        %v342 = vadd.f32 %v334, %v340
        %v343 = vadd.f32 %v335, %v341
        %s344 = sld [smem:[#allocation3 + $0x8]]
        %v345 = vstv %s344
        %v346 = vmul.f32 %v345, %v337
        %v347 = vmul.f32 %v345, %v338
        %350 = vrot.lane.b32.xlu0 %v346, 127
        %v351 = vpop.permute.xlu0 %350
        %352 = vrot.lane.b32.xlu0 %v347, 127
        %v353 = vpop.permute.xlu0 %352
        %v356 = vadd.f32 %v342, %v351
        %v357 = vadd.f32 %v343, %v353
        %s358 = sld [smem:[#allocation3 + $0x9]]
        %v359 = vstv %s358
        %v360 = vmul.f32 %v359, %v337
        %v361 = vmul.f32 %v359, %v338
        %364 = vrot.lane.b32.xlu0 %v360, 126
        %v365 = vpop.permute.xlu0 %364
        %366 = vrot.lane.b32.xlu0 %v361, 126
        %v367 = vpop.permute.xlu0 %366
        %v370 = vadd.f32 %v356, %v365
        %v371 = vadd.f32 %v357, %v367
        %s372 = sld [smem:[#allocation3 + $0xa]]
        %v373 = vstv %s372
        %v374 = vmul.f32 %v373, %v337
        %v375 = vmul.f32 %v373, %v338
        %378 = vrot.lane.b32.xlu0 %v374, 125
        %v379 = vpop.permute.xlu0 %378
        %380 = vrot.lane.b32.xlu0 %v375, 125
        %v381 = vpop.permute.xlu0 %380
        %v384 = vadd.f32 %v370, %v379
        %v385 = vadd.f32 %v371, %v381
        %s386 = sld [smem:[#allocation3 + $0xb]]
        %v387 = vstv %s386
        %v388 = vmul.f32 %v387, %v337
        %v389 = vmul.f32 %v387, %v338
        %392 = vrot.lane.b32.xlu0 %v388, 124
        %v393 = vpop.permute.xlu0 %392
        %394 = vrot.lane.b32.xlu0 %v389, 124
        %v395 = vpop.permute.xlu0 %394
        %v398 = vadd.f32 %v384, %v393
        %v399 = vadd.f32 %v385, %v395
        %s400 = sld [smem:[#allocation3 + $0xc]]
        %v401 = vstv %s400
        %v402 = vmul.f32 %v401, %v337
        %v403 = vmul.f32 %v401, %v338
        %406 = vrot.lane.b32.xlu0 %v402, 123
        %v407 = vpop.permute.xlu0 %406
        %408 = vrot.lane.b32.xlu0 %v403, 123
        %v409 = vpop.permute.xlu0 %408
        %v412 = vadd.f32 %v398, %v407
        %v413 = vadd.f32 %v399, %v409
        %s414 = sld [smem:[#allocation3 + $0xd]]
        %v415 = vstv %s414
        %v416 = vmul.f32 %v415, %v337
        %v417 = vmul.f32 %v415, %v338
        %420 = vrot.lane.b32.xlu0 %v416, 122
        %v421 = vpop.permute.xlu0 %420
        %422 = vrot.lane.b32.xlu0 %v417, 122
        %v423 = vpop.permute.xlu0 %422
        %v426 = vadd.f32 %v412, %v421
        %v427 = vadd.f32 %v413, %v423
        %s428 = sld [smem:[#allocation3 + $0xe]]
        %v429 = vld [vmem:[#allocation2 + $0x2] sm:$0xff]
        %v430 = vld [vmem:[#allocation2 + $0xa] sm:$0xff]
        %v431 = vstv %s428
        %v432 = vmul.f32 %v431, %v429
        %v433 = vmul.f32 %v431, %v430
        %v434 = vadd.f32 %v426, %v432
        %v435 = vadd.f32 %v427, %v433
        %s436 = sld [smem:[#allocation3 + $0xf]]
        %v437 = vstv %s436
        %v438 = vmul.f32 %v437, %v429
        %v439 = vmul.f32 %v437, %v430
        %442 = vrot.lane.b32.xlu0 %v438, 127
        %v443 = vpop.permute.xlu0 %442
        %444 = vrot.lane.b32.xlu0 %v439, 127
        %v445 = vpop.permute.xlu0 %444
        %v448 = vadd.f32 %v434, %v443
        %v449 = vadd.f32 %v435, %v445
        %s450 = sld [smem:[#allocation3 + $0x10]]
        %v451 = vstv %s450
        %v452 = vmul.f32 %v451, %v429
        %v453 = vmul.f32 %v451, %v430
        %456 = vrot.lane.b32.xlu0 %v452, 126
        %v457 = vpop.permute.xlu0 %456
        %458 = vrot.lane.b32.xlu0 %v453, 126
        %v459 = vpop.permute.xlu0 %458
        %v462 = vadd.f32 %v448, %v457
        %v463 = vadd.f32 %v449, %v459
        %s464 = sld [smem:[#allocation3 + $0x11]]
        %v465 = vstv %s464
        %v466 = vmul.f32 %v465, %v429
        %v467 = vmul.f32 %v465, %v430
        %470 = vrot.lane.b32.xlu0 %v466, 125
        %v471 = vpop.permute.xlu0 %470
        %472 = vrot.lane.b32.xlu0 %v467, 125
        %v473 = vpop.permute.xlu0 %472
        %v476 = vadd.f32 %v462, %v471
        %v477 = vadd.f32 %v463, %v473
        %s478 = sld [smem:[#allocation3 + $0x12]]
        %v479 = vstv %s478
        %v480 = vmul.f32 %v479, %v429
        %v481 = vmul.f32 %v479, %v430
        %484 = vrot.lane.b32.xlu0 %v480, 124
        %v485 = vpop.permute.xlu0 %484
        %486 = vrot.lane.b32.xlu0 %v481, 124
        %v487 = vpop.permute.xlu0 %486
        %v490 = vadd.f32 %v476, %v485
        %v491 = vadd.f32 %v477, %v487
        %s492 = sld [smem:[#allocation3 + $0x13]]
        %v493 = vstv %s492
        %v494 = vmul.f32 %v493, %v429
        %v495 = vmul.f32 %v493, %v430
        %498 = vrot.lane.b32.xlu0 %v494, 123
        %v499 = vpop.permute.xlu0 %498
        %500 = vrot.lane.b32.xlu0 %v495, 123
        %v501 = vpop.permute.xlu0 %500
        %v504 = vadd.f32 %v490, %v499
        %v505 = vadd.f32 %v491, %v501
        %s506 = sld [smem:[#allocation3 + $0x14]]
        %v507 = vstv %s506
        %v508 = vmul.f32 %v507, %v429
        %v509 = vmul.f32 %v507, %v430
        %512 = vrot.lane.b32.xlu0 %v508, 122
        %v513 = vpop.permute.xlu0 %512
        %514 = vrot.lane.b32.xlu0 %v509, 122
        %v515 = vpop.permute.xlu0 %514
        %v518 = vadd.f32 %v504, %v513
        %v519 = vadd.f32 %v505, %v515
        %s520 = sld [smem:[#allocation3 + $0x15]]
        %v521 = vld [vmem:[#allocation2 + $0x3] sm:$0xff]
        %v522 = vld [vmem:[#allocation2 + $0xb] sm:$0xff]
        %v523 = vstv %s520
        %v524 = vmul.f32 %v523, %v521
        %v525 = vmul.f32 %v523, %v522
        %v526 = vadd.f32 %v518, %v524
        %v527 = vadd.f32 %v519, %v525
        %s528 = sld [smem:[#allocation3 + $0x16]]
        %v529 = vstv %s528
        %v530 = vmul.f32 %v529, %v521
        %v531 = vmul.f32 %v529, %v522
        %534 = vrot.lane.b32.xlu0 %v530, 127
        %v535 = vpop.permute.xlu0 %534
        %536 = vrot.lane.b32.xlu0 %v531, 127
        %v537 = vpop.permute.xlu0 %536
        %v540 = vadd.f32 %v526, %v535
        %v541 = vadd.f32 %v527, %v537
        %s542 = sld [smem:[#allocation3 + $0x17]]
        %v543 = vstv %s542
        %v544 = vmul.f32 %v543, %v521
        %v545 = vmul.f32 %v543, %v522
        %548 = vrot.lane.b32.xlu0 %v544, 126
        %v549 = vpop.permute.xlu0 %548
        %550 = vrot.lane.b32.xlu0 %v545, 126
        %v551 = vpop.permute.xlu0 %550
        %v554 = vadd.f32 %v540, %v549
        %v555 = vadd.f32 %v541, %v551
        %s556 = sld [smem:[#allocation3 + $0x18]]
        %v557 = vstv %s556
        %v558 = vmul.f32 %v557, %v521
        %v559 = vmul.f32 %v557, %v522
        %562 = vrot.lane.b32.xlu0 %v558, 125
        %v563 = vpop.permute.xlu0 %562
        %564 = vrot.lane.b32.xlu0 %v559, 125
        %v565 = vpop.permute.xlu0 %564
        %v568 = vadd.f32 %v554, %v563
        %v569 = vadd.f32 %v555, %v565
        %s570 = sld [smem:[#allocation3 + $0x19]]
        %v571 = vstv %s570
        %v572 = vmul.f32 %v571, %v521
        %v573 = vmul.f32 %v571, %v522
        %576 = vrot.lane.b32.xlu0 %v572, 124
        %v577 = vpop.permute.xlu0 %576
        %578 = vrot.lane.b32.xlu0 %v573, 124
        %v579 = vpop.permute.xlu0 %578
        %v582 = vadd.f32 %v568, %v577
        %v583 = vadd.f32 %v569, %v579
        %s584 = sld [smem:[#allocation3 + $0x1a]]
        %v585 = vstv %s584
        %v586 = vmul.f32 %v585, %v521
        %v587 = vmul.f32 %v585, %v522
        %590 = vrot.lane.b32.xlu0 %v586, 123
        %v591 = vpop.permute.xlu0 %590
        %592 = vrot.lane.b32.xlu0 %v587, 123
        %v593 = vpop.permute.xlu0 %592
        %v596 = vadd.f32 %v582, %v591
        %v597 = vadd.f32 %v583, %v593
        %s598 = sld [smem:[#allocation3 + $0x1b]]
        %v599 = vstv %s598
        %v600 = vmul.f32 %v599, %v521
        %v601 = vmul.f32 %v599, %v522
        %604 = vrot.lane.b32.xlu0 %v600, 122
        %v605 = vpop.permute.xlu0 %604
        %606 = vrot.lane.b32.xlu0 %v601, 122
        %v607 = vpop.permute.xlu0 %606
        %v610 = vadd.f32 %v596, %v605
        %v611 = vadd.f32 %v597, %v607
        %s612 = sld [smem:[#allocation3 + $0x1c]]
        %v613 = vld [vmem:[#allocation2 + $0x4] sm:$0xff]
        %v614 = vld [vmem:[#allocation2 + $0xc] sm:$0xff]
        %v615 = vstv %s612
        %v616 = vmul.f32 %v615, %v613
        %v617 = vmul.f32 %v615, %v614
        %v618 = vadd.f32 %v610, %v616
        %v619 = vadd.f32 %v611, %v617
        %s620 = sld [smem:[#allocation3 + $0x1d]]
        %v621 = vstv %s620
        %v622 = vmul.f32 %v621, %v613
        %v623 = vmul.f32 %v621, %v614
        %626 = vrot.lane.b32.xlu0 %v622, 127
        %v627 = vpop.permute.xlu0 %626
        %628 = vrot.lane.b32.xlu0 %v623, 127
        %v629 = vpop.permute.xlu0 %628
        %v632 = vadd.f32 %v618, %v627
        %v633 = vadd.f32 %v619, %v629
        %s634 = sld [smem:[#allocation3 + $0x1e]]
        %v635 = vstv %s634
        %v636 = vmul.f32 %v635, %v613
        %v637 = vmul.f32 %v635, %v614
        %640 = vrot.lane.b32.xlu0 %v636, 126
        %v641 = vpop.permute.xlu0 %640
        %642 = vrot.lane.b32.xlu0 %v637, 126
        %v643 = vpop.permute.xlu0 %642
        %v646 = vadd.f32 %v632, %v641
        %v647 = vadd.f32 %v633, %v643
        %s648 = sld [smem:[#allocation3 + $0x1f]]
        %v649 = vstv %s648
        %v650 = vmul.f32 %v649, %v613
        %v651 = vmul.f32 %v649, %v614
        %654 = vrot.lane.b32.xlu0 %v650, 125
        %v655 = vpop.permute.xlu0 %654
        %656 = vrot.lane.b32.xlu0 %v651, 125
        %v657 = vpop.permute.xlu0 %656
        %v660 = vadd.f32 %v646, %v655
        %v661 = vadd.f32 %v647, %v657
        %s662 = sld [smem:[#allocation3 + $0x20]]
        %v663 = vstv %s662
        %v664 = vmul.f32 %v663, %v613
        %v665 = vmul.f32 %v663, %v614
        %668 = vrot.lane.b32.xlu0 %v664, 124
        %v669 = vpop.permute.xlu0 %668
        %670 = vrot.lane.b32.xlu0 %v665, 124
        %v671 = vpop.permute.xlu0 %670
        %v674 = vadd.f32 %v660, %v669
        %v675 = vadd.f32 %v661, %v671
        %s676 = sld [smem:[#allocation3 + $0x21]]
        %v677 = vstv %s676
        %v678 = vmul.f32 %v677, %v613
        %v679 = vmul.f32 %v677, %v614
        %682 = vrot.lane.b32.xlu0 %v678, 123
        %v683 = vpop.permute.xlu0 %682
        %684 = vrot.lane.b32.xlu0 %v679, 123
        %v685 = vpop.permute.xlu0 %684
        %v688 = vadd.f32 %v674, %v683
        %v689 = vadd.f32 %v675, %v685
        %s690 = sld [smem:[#allocation3 + $0x22]]
        %v691 = vstv %s690
        %v692 = vmul.f32 %v691, %v613
        %v693 = vmul.f32 %v691, %v614
        %696 = vrot.lane.b32.xlu0 %v692, 122
        %v697 = vpop.permute.xlu0 %696
        %698 = vrot.lane.b32.xlu0 %v693, 122
        %v699 = vpop.permute.xlu0 %698
        %v702 = vadd.f32 %v688, %v697
        %v703 = vadd.f32 %v689, %v699
        %s704 = sld [smem:[#allocation3 + $0x23]]
        %v705 = vld [vmem:[#allocation2 + $0x5] sm:$0xff]
        %v706 = vld [vmem:[#allocation2 + $0xd] sm:$0xff]
        %v707 = vstv %s704
        %v708 = vmul.f32 %v707, %v705
        %v709 = vmul.f32 %v707, %v706
        %v710 = vadd.f32 %v702, %v708
        %v711 = vadd.f32 %v703, %v709
        %s712 = sld [smem:[#allocation3 + $0x24]]
        %v713 = vstv %s712
        %v714 = vmul.f32 %v713, %v705
        %v715 = vmul.f32 %v713, %v706
        %718 = vrot.lane.b32.xlu0 %v714, 127
        %v719 = vpop.permute.xlu0 %718
        %720 = vrot.lane.b32.xlu0 %v715, 127
        %v721 = vpop.permute.xlu0 %720
        %v724 = vadd.f32 %v710, %v719
        %v725 = vadd.f32 %v711, %v721
        %s726 = sld [smem:[#allocation3 + $0x25]]
        %v727 = vstv %s726
        %v728 = vmul.f32 %v727, %v705
        %v729 = vmul.f32 %v727, %v706
        %732 = vrot.lane.b32.xlu0 %v728, 126
        %v733 = vpop.permute.xlu0 %732
        %734 = vrot.lane.b32.xlu0 %v729, 126
        %v735 = vpop.permute.xlu0 %734
        %v738 = vadd.f32 %v724, %v733
        %v739 = vadd.f32 %v725, %v735
        %s740 = sld [smem:[#allocation3 + $0x26]]
        %v741 = vstv %s740
        %v742 = vmul.f32 %v741, %v705
        %v743 = vmul.f32 %v741, %v706
        %746 = vrot.lane.b32.xlu0 %v742, 125
        %v747 = vpop.permute.xlu0 %746
        %748 = vrot.lane.b32.xlu0 %v743, 125
        %v749 = vpop.permute.xlu0 %748
        %v752 = vadd.f32 %v738, %v747
        %v753 = vadd.f32 %v739, %v749
        %s754 = sld [smem:[#allocation3 + $0x27]]
        %v755 = vstv %s754
        %v756 = vmul.f32 %v755, %v705
        %v757 = vmul.f32 %v755, %v706
        %760 = vrot.lane.b32.xlu0 %v756, 124
        %v761 = vpop.permute.xlu0 %760
        %762 = vrot.lane.b32.xlu0 %v757, 124
        %v763 = vpop.permute.xlu0 %762
        %v766 = vadd.f32 %v752, %v761
        %v767 = vadd.f32 %v753, %v763
        %s768 = sld [smem:[#allocation3 + $0x28]]
        %v769 = vstv %s768
        %v770 = vmul.f32 %v769, %v705
        %v771 = vmul.f32 %v769, %v706
        %774 = vrot.lane.b32.xlu0 %v770, 123
        %v775 = vpop.permute.xlu0 %774
        %776 = vrot.lane.b32.xlu0 %v771, 123
        %v777 = vpop.permute.xlu0 %776
        %v780 = vadd.f32 %v766, %v775
        %v781 = vadd.f32 %v767, %v777
        %s782 = sld [smem:[#allocation3 + $0x29]]
        %v783 = vstv %s782
        %v784 = vmul.f32 %v783, %v705
        %v785 = vmul.f32 %v783, %v706
        %788 = vrot.lane.b32.xlu0 %v784, 122
        %v789 = vpop.permute.xlu0 %788
        %790 = vrot.lane.b32.xlu0 %v785, 122
        %v791 = vpop.permute.xlu0 %790
        %v794 = vadd.f32 %v780, %v789
        %v795 = vadd.f32 %v781, %v791
        %s796 = sld [smem:[#allocation3 + $0x2a]]
        %v797 = vld [vmem:[#allocation2 + $0x6] sm:$0xff]
        %v798 = vld [vmem:[#allocation2 + $0xe] sm:$0xff]
        %v799 = vstv %s796
        %v800 = vmul.f32 %v799, %v797
        %v801 = vmul.f32 %v799, %v798
        %v802 = vadd.f32 %v794, %v800
        %v803 = vadd.f32 %v795, %v801
        %s804 = sld [smem:[#allocation3 + $0x2b]]
        %v805 = vstv %s804
        %v806 = vmul.f32 %v805, %v797
        %v807 = vmul.f32 %v805, %v798
        %810 = vrot.lane.b32.xlu0 %v806, 127
        %v811 = vpop.permute.xlu0 %810
        %812 = vrot.lane.b32.xlu0 %v807, 127
        %v813 = vpop.permute.xlu0 %812
        %v816 = vadd.f32 %v802, %v811
        %v817 = vadd.f32 %v803, %v813
        %s818 = sld [smem:[#allocation3 + $0x2c]]
        %v819 = vstv %s818
        %v820 = vmul.f32 %v819, %v797
        %v821 = vmul.f32 %v819, %v798
        %824 = vrot.lane.b32.xlu0 %v820, 126
        %v825 = vpop.permute.xlu0 %824
        %826 = vrot.lane.b32.xlu0 %v821, 126
        %v827 = vpop.permute.xlu0 %826
        %v830 = vadd.f32 %v816, %v825
        %v831 = vadd.f32 %v817, %v827
        %s832 = sld [smem:[#allocation3 + $0x2d]]
        %v833 = vstv %s832
        %v834 = vmul.f32 %v833, %v797
        %v835 = vmul.f32 %v833, %v798
        %838 = vrot.lane.b32.xlu0 %v834, 125
        %v839 = vpop.permute.xlu0 %838
        %840 = vrot.lane.b32.xlu0 %v835, 125
        %v841 = vpop.permute.xlu0 %840
        %v844 = vadd.f32 %v830, %v839
        %v845 = vadd.f32 %v831, %v841
        %s846 = sld [smem:[#allocation3 + $0x2e]]
        %v847 = vstv %s846
        %v848 = vmul.f32 %v847, %v797
        %v849 = vmul.f32 %v847, %v798
        %852 = vrot.lane.b32.xlu0 %v848, 124
        %v853 = vpop.permute.xlu0 %852
        %854 = vrot.lane.b32.xlu0 %v849, 124
        %v855 = vpop.permute.xlu0 %854
        %v858 = vadd.f32 %v844, %v853
        %v859 = vadd.f32 %v845, %v855
        %s860 = sld [smem:[#allocation3 + $0x2f]]
        %v861 = vstv %s860
        %v862 = vmul.f32 %v861, %v797
        %v863 = vmul.f32 %v861, %v798
        %866 = vrot.lane.b32.xlu0 %v862, 123
        %v867 = vpop.permute.xlu0 %866
        %868 = vrot.lane.b32.xlu0 %v863, 123
        %v869 = vpop.permute.xlu0 %868
        %v872 = vadd.f32 %v858, %v867
        %v873 = vadd.f32 %v859, %v869
        %s874 = sld [smem:[#allocation3 + $0x30]]
        %v875 = vstv %s874
        %v876 = vmul.f32 %v875, %v797
        %v877 = vmul.f32 %v875, %v798
        %880 = vrot.lane.b32.xlu0 %v876, 122
        %v881 = vpop.permute.xlu0 %880
        %882 = vrot.lane.b32.xlu0 %v877, 122
        %v883 = vpop.permute.xlu0 %882
        %v886 = vadd.f32 %v872, %v881
        %v887 = vadd.f32 %v873, %v883
        %s888 = sld [smem:[#allocation3 + $0x31]]
        %v889 = vld [vmem:[%s241] sm:$0xff]
        %v890 = vld [vmem:[%s241 + $0x8] sm:$0xff]
        %v891 = vstv %s888
        %v892 = vmul.f32 %v891, %v889
        %v893 = vmul.f32 %v891, %v890
        %v894 = vadd.f32 %v886, %v892
        %v895 = vadd.f32 %v887, %v893
        %s896 = sld [smem:[#allocation3 + $0x32]]
        %v897 = vstv %s896
        %v898 = vmul.f32 %v897, %v889
        %v899 = vmul.f32 %v897, %v890
        %902 = vrot.lane.b32.xlu0 %v898, 127
        %v903 = vpop.permute.xlu0 %902
        %904 = vrot.lane.b32.xlu0 %v899, 127
        %v905 = vpop.permute.xlu0 %904
        %v908 = vadd.f32 %v894, %v903
        %v909 = vadd.f32 %v895, %v905
        %s910 = sld [smem:[#allocation3 + $0x33]]
        %v911 = vstv %s910
        %v912 = vmul.f32 %v911, %v889
        %v913 = vmul.f32 %v911, %v890
        %916 = vrot.lane.b32.xlu0 %v912, 126
        %v917 = vpop.permute.xlu0 %916
        %918 = vrot.lane.b32.xlu0 %v913, 126
        %v919 = vpop.permute.xlu0 %918
        %v922 = vadd.f32 %v908, %v917
        %v923 = vadd.f32 %v909, %v919
        %s924 = sld [smem:[#allocation3 + $0x34]]
        %v925 = vstv %s924
        %v926 = vmul.f32 %v925, %v889
        %v927 = vmul.f32 %v925, %v890
        %930 = vrot.lane.b32.xlu0 %v926, 125
        %v931 = vpop.permute.xlu0 %930
        %932 = vrot.lane.b32.xlu0 %v927, 125
        %v933 = vpop.permute.xlu0 %932
        %v936 = vadd.f32 %v922, %v931
        %v937 = vadd.f32 %v923, %v933
        %s938 = sld [smem:[#allocation3 + $0x35]]
        %v939 = vstv %s938
        %v940 = vmul.f32 %v939, %v889
        %v941 = vmul.f32 %v939, %v890
        %944 = vrot.lane.b32.xlu0 %v940, 124
        %v945 = vpop.permute.xlu0 %944
        %946 = vrot.lane.b32.xlu0 %v941, 124
        %v947 = vpop.permute.xlu0 %946
        %v950 = vadd.f32 %v936, %v945
        %v951 = vadd.f32 %v937, %v947
        %s952 = sld [smem:[#allocation3 + $0x36]]
        %v953 = vstv %s952
        %v954 = vmul.f32 %v953, %v889
        %v955 = vmul.f32 %v953, %v890
        %958 = vrot.lane.b32.xlu0 %v954, 123
        %v959 = vpop.permute.xlu0 %958
        %960 = vrot.lane.b32.xlu0 %v955, 123
        %v961 = vpop.permute.xlu0 %960
        %v964 = vadd.f32 %v950, %v959
        %v965 = vadd.f32 %v951, %v961
        %s966 = sld [smem:[#allocation3 + $0x37]]
        %v967 = vstv %s966
        %v968 = vmul.f32 %v967, %v889
        %v969 = vmul.f32 %v967, %v890
        %972 = vrot.lane.b32.xlu0 %v968, 122
        %v973 = vpop.permute.xlu0 %972
        %974 = vrot.lane.b32.xlu0 %v969, 122
        %v975 = vpop.permute.xlu0 %974
        %v978 = vadd.f32 %v964, %v973
        %v979 = vadd.f32 %v965, %v975
        %s980 = sld [smem:[#allocation3 + $0x38]]
        %v981 = vld [vmem:[%s241 + $0x1] sm:$0xff]
        %v982 = vld [vmem:[%s241 + $0x9] sm:$0xff]
        %v983 = vstv %s980
        %v984 = vmul.f32 %v983, %v981
        %v985 = vmul.f32 %v983, %v982
        %v986 = vadd.f32 %v978, %v984
        %v987 = vadd.f32 %v979, %v985
        %s988 = sld [smem:[#allocation3 + $0x39]]
        %v989 = vstv %s988
        %v990 = vmul.f32 %v989, %v981
        %v991 = vmul.f32 %v989, %v982
        %994 = vrot.lane.b32.xlu0 %v990, 127
        %v995 = vpop.permute.xlu0 %994
        %996 = vrot.lane.b32.xlu0 %v991, 127
        %v997 = vpop.permute.xlu0 %996
        %v1000 = vadd.f32 %v986, %v995
        %v1001 = vadd.f32 %v987, %v997
        %s1002 = sld [smem:[#allocation3 + $0x3a]]
        %v1003 = vstv %s1002
        %v1004 = vmul.f32 %v1003, %v981
        %v1005 = vmul.f32 %v1003, %v982
        %1008 = vrot.lane.b32.xlu0 %v1004, 126
        %v1009 = vpop.permute.xlu0 %1008
        %1010 = vrot.lane.b32.xlu0 %v1005, 126
        %v1011 = vpop.permute.xlu0 %1010
        %v1014 = vadd.f32 %v1000, %v1009
        %v1015 = vadd.f32 %v1001, %v1011
        %s1016 = sld [smem:[#allocation3 + $0x3b]]
        %v1017 = vstv %s1016
        %v1018 = vmul.f32 %v1017, %v981
        %v1019 = vmul.f32 %v1017, %v982
        %1022 = vrot.lane.b32.xlu0 %v1018, 125
        %v1023 = vpop.permute.xlu0 %1022
        %1024 = vrot.lane.b32.xlu0 %v1019, 125
        %v1025 = vpop.permute.xlu0 %1024
        %v1028 = vadd.f32 %v1014, %v1023
        %v1029 = vadd.f32 %v1015, %v1025
        %s1030 = sld [smem:[#allocation3 + $0x3c]]
        %v1031 = vstv %s1030
        %v1032 = vmul.f32 %v1031, %v981
        %v1033 = vmul.f32 %v1031, %v982
        %1036 = vrot.lane.b32.xlu0 %v1032, 124
        %v1037 = vpop.permute.xlu0 %1036
        %1038 = vrot.lane.b32.xlu0 %v1033, 124
        %v1039 = vpop.permute.xlu0 %1038
        %v1042 = vadd.f32 %v1028, %v1037
        %v1043 = vadd.f32 %v1029, %v1039
        %s1044 = sld [smem:[#allocation3 + $0x3d]]
        %v1045 = vstv %s1044
        %v1046 = vmul.f32 %v1045, %v981
        %v1047 = vmul.f32 %v1045, %v982
        %1050 = vrot.lane.b32.xlu0 %v1046, 123
        %v1051 = vpop.permute.xlu0 %1050
        %1052 = vrot.lane.b32.xlu0 %v1047, 123
        %v1053 = vpop.permute.xlu0 %1052
        %v1056 = vadd.f32 %v1042, %v1051
        %v1057 = vadd.f32 %v1043, %v1053
        %s1058 = sld [smem:[#allocation3 + $0x3e]]
        %v1059 = vstv %s1058
        %v1060 = vmul.f32 %v1059, %v981
        %v1061 = vmul.f32 %v1059, %v982
        %1064 = vrot.lane.b32.xlu0 %v1060, 122
        %v1065 = vpop.permute.xlu0 %1064
        %1066 = vrot.lane.b32.xlu0 %v1061, 122
        %v1067 = vpop.permute.xlu0 %1066
        %v1070 = vadd.f32 %v1056, %v1065
        %v1071 = vadd.f32 %v1057, %v1067
        %s1072 = sld [smem:[#allocation3 + $0x3f]]
        %v1073 = vld [vmem:[%s241 + $0x2] sm:$0xff]
        %v1074 = vld [vmem:[%s241 + $0xa] sm:$0xff]
        %v1075 = vstv %s1072
        %v1076 = vmul.f32 %v1075, %v1073
        %v1077 = vmul.f32 %v1075, %v1074
        %v1078 = vadd.f32 %v1070, %v1076
        %v1079 = vadd.f32 %v1071, %v1077
        %s1080 = sld [smem:[#allocation3 + $0x40]]
        %v1081 = vstv %s1080
        %v1082 = vmul.f32 %v1081, %v1073
        %v1083 = vmul.f32 %v1081, %v1074
        %1086 = vrot.lane.b32.xlu0 %v1082, 127
        %v1087 = vpop.permute.xlu0 %1086
        %1088 = vrot.lane.b32.xlu0 %v1083, 127
        %v1089 = vpop.permute.xlu0 %1088
        %v1092 = vadd.f32 %v1078, %v1087
        %v1093 = vadd.f32 %v1079, %v1089
        %s1094 = sld [smem:[#allocation3 + $0x41]]
        %v1095 = vstv %s1094
        %v1096 = vmul.f32 %v1095, %v1073
        %v1097 = vmul.f32 %v1095, %v1074
        %1100 = vrot.lane.b32.xlu0 %v1096, 126
        %v1101 = vpop.permute.xlu0 %1100
        %1102 = vrot.lane.b32.xlu0 %v1097, 126
        %v1103 = vpop.permute.xlu0 %1102
        %v1106 = vadd.f32 %v1092, %v1101
        %v1107 = vadd.f32 %v1093, %v1103
        %s1108 = sld [smem:[#allocation3 + $0x42]]
        %v1109 = vstv %s1108
        %v1110 = vmul.f32 %v1109, %v1073
        %v1111 = vmul.f32 %v1109, %v1074
        %1114 = vrot.lane.b32.xlu0 %v1110, 125
        %v1115 = vpop.permute.xlu0 %1114
        %1116 = vrot.lane.b32.xlu0 %v1111, 125
        %v1117 = vpop.permute.xlu0 %1116
        %v1120 = vadd.f32 %v1106, %v1115
        %v1121 = vadd.f32 %v1107, %v1117
        %s1122 = sld [smem:[#allocation3 + $0x43]]
        %v1123 = vstv %s1122
        %v1124 = vmul.f32 %v1123, %v1073
        %v1125 = vmul.f32 %v1123, %v1074
        %1128 = vrot.lane.b32.xlu0 %v1124, 124
        %v1129 = vpop.permute.xlu0 %1128
        %1130 = vrot.lane.b32.xlu0 %v1125, 124
        %v1131 = vpop.permute.xlu0 %1130
        %v1134 = vadd.f32 %v1120, %v1129
        %v1135 = vadd.f32 %v1121, %v1131
        %s1136 = sld [smem:[#allocation3 + $0x44]]
        %v1137 = vstv %s1136
        %v1138 = vmul.f32 %v1137, %v1073
        %v1139 = vmul.f32 %v1137, %v1074
        %1142 = vrot.lane.b32.xlu0 %v1138, 123
        %v1143 = vpop.permute.xlu0 %1142
        %1144 = vrot.lane.b32.xlu0 %v1139, 123
        %v1145 = vpop.permute.xlu0 %1144
        %v1148 = vadd.f32 %v1134, %v1143
        %v1149 = vadd.f32 %v1135, %v1145
        %s1150 = sld [smem:[#allocation3 + $0x45]]
        %v1151 = vstv %s1150
        %v1152 = vmul.f32 %v1151, %v1073
        %v1153 = vmul.f32 %v1151, %v1074
        %1156 = vrot.lane.b32.xlu0 %v1152, 122
        %v1157 = vpop.permute.xlu0 %1156
        %1158 = vrot.lane.b32.xlu0 %v1153, 122
        %v1159 = vpop.permute.xlu0 %1158
        %v1162 = vadd.f32 %v1148, %v1157
        %v1163 = vadd.f32 %v1149, %v1159
        %s1164 = sld [smem:[#allocation3 + $0x46]]
        %v1165 = vld [vmem:[%s241 + $0x3] sm:$0xff]
        %v1166 = vld [vmem:[%s241 + $0xb] sm:$0xff]
        %v1167 = vstv %s1164
        %v1168 = vmul.f32 %v1167, %v1165
        %v1169 = vmul.f32 %v1167, %v1166
        %v1170 = vadd.f32 %v1162, %v1168
        %v1171 = vadd.f32 %v1163, %v1169
        %s1172 = sld [smem:[#allocation3 + $0x47]]
        %v1173 = vstv %s1172
        %v1174 = vmul.f32 %v1173, %v1165
        %v1175 = vmul.f32 %v1173, %v1166
        %1178 = vrot.lane.b32.xlu0 %v1174, 127
        %v1179 = vpop.permute.xlu0 %1178
        %1180 = vrot.lane.b32.xlu0 %v1175, 127
        %v1181 = vpop.permute.xlu0 %1180
        %v1184 = vadd.f32 %v1170, %v1179
        %v1185 = vadd.f32 %v1171, %v1181
        %s1186 = sld [smem:[#allocation3 + $0x48]]
        %v1187 = vstv %s1186
        %v1188 = vmul.f32 %v1187, %v1165
        %v1189 = vmul.f32 %v1187, %v1166
        %1192 = vrot.lane.b32.xlu0 %v1188, 126
        %v1193 = vpop.permute.xlu0 %1192
        %1194 = vrot.lane.b32.xlu0 %v1189, 126
        %v1195 = vpop.permute.xlu0 %1194
        %v1198 = vadd.f32 %v1184, %v1193
        %v1199 = vadd.f32 %v1185, %v1195
        %s1200 = sld [smem:[#allocation3 + $0x49]]
        %v1201 = vstv %s1200
        %v1202 = vmul.f32 %v1201, %v1165
        %v1203 = vmul.f32 %v1201, %v1166
        %1206 = vrot.lane.b32.xlu0 %v1202, 125
        %v1207 = vpop.permute.xlu0 %1206
        %1208 = vrot.lane.b32.xlu0 %v1203, 125
        %v1209 = vpop.permute.xlu0 %1208
        %v1212 = vadd.f32 %v1198, %v1207
        %v1213 = vadd.f32 %v1199, %v1209
        %s1214 = sld [smem:[#allocation3 + $0x4a]]
        %v1215 = vstv %s1214
        %v1216 = vmul.f32 %v1215, %v1165
        %v1217 = vmul.f32 %v1215, %v1166
        %1220 = vrot.lane.b32.xlu0 %v1216, 124
        %v1221 = vpop.permute.xlu0 %1220
        %1222 = vrot.lane.b32.xlu0 %v1217, 124
        %v1223 = vpop.permute.xlu0 %1222
        %v1226 = vadd.f32 %v1212, %v1221
        %v1227 = vadd.f32 %v1213, %v1223
        %s1228 = sld [smem:[#allocation3 + $0x4b]]
        %v1229 = vstv %s1228
        %v1230 = vmul.f32 %v1229, %v1165
        %v1231 = vmul.f32 %v1229, %v1166
        %1234 = vrot.lane.b32.xlu0 %v1230, 123
        %v1235 = vpop.permute.xlu0 %1234
        %1236 = vrot.lane.b32.xlu0 %v1231, 123
        %v1237 = vpop.permute.xlu0 %1236
        %v1240 = vadd.f32 %v1226, %v1235
        %v1241 = vadd.f32 %v1227, %v1237
        %s1242 = sld [smem:[#allocation3 + $0x4c]]
        %v1243 = vstv %s1242
        %v1244 = vmul.f32 %v1243, %v1165
        %v1245 = vmul.f32 %v1243, %v1166
        %1248 = vrot.lane.b32.xlu0 %v1244, 122
        %v1249 = vpop.permute.xlu0 %1248
        %1250 = vrot.lane.b32.xlu0 %v1245, 122
        %v1251 = vpop.permute.xlu0 %1250
        %v1254 = vadd.f32 %v1240, %v1249
        %v1255 = vadd.f32 %v1241, %v1251
        %s1256 = sld [smem:[#allocation3 + $0x4d]]
        %v1257 = vld [vmem:[%s241 + $0x4] sm:$0xff]
        %v1258 = vld [vmem:[%s241 + $0xc] sm:$0xff]
        %v1259 = vstv %s1256
        %v1260 = vmul.f32 %v1259, %v1257
        %v1261 = vmul.f32 %v1259, %v1258
        %v1262 = vadd.f32 %v1254, %v1260
        %v1263 = vadd.f32 %v1255, %v1261
        %s1264 = sld [smem:[#allocation3 + $0x4e]]
        %v1265 = vstv %s1264
        %v1266 = vmul.f32 %v1265, %v1257
        %v1267 = vmul.f32 %v1265, %v1258
        %1270 = vrot.lane.b32.xlu0 %v1266, 127
        %v1271 = vpop.permute.xlu0 %1270
        %1272 = vrot.lane.b32.xlu0 %v1267, 127
        %v1273 = vpop.permute.xlu0 %1272
        %v1276 = vadd.f32 %v1262, %v1271
        %v1277 = vadd.f32 %v1263, %v1273
        %s1278 = sld [smem:[#allocation3 + $0x4f]]
        %v1279 = vstv %s1278
        %v1280 = vmul.f32 %v1279, %v1257
        %v1281 = vmul.f32 %v1279, %v1258
        %1284 = vrot.lane.b32.xlu0 %v1280, 126
        %v1285 = vpop.permute.xlu0 %1284
        %1286 = vrot.lane.b32.xlu0 %v1281, 126
        %v1287 = vpop.permute.xlu0 %1286
        %v1290 = vadd.f32 %v1276, %v1285
        %v1291 = vadd.f32 %v1277, %v1287
        %s1292 = sld [smem:[#allocation3 + $0x50]]
        %v1293 = vstv %s1292
        %v1294 = vmul.f32 %v1293, %v1257
        %v1295 = vmul.f32 %v1293, %v1258
        %1298 = vrot.lane.b32.xlu0 %v1294, 125
        %v1299 = vpop.permute.xlu0 %1298
        %1300 = vrot.lane.b32.xlu0 %v1295, 125
        %v1301 = vpop.permute.xlu0 %1300
        %v1304 = vadd.f32 %v1290, %v1299
        %v1305 = vadd.f32 %v1291, %v1301
        %s1306 = sld [smem:[#allocation3 + $0x51]]
        %v1307 = vstv %s1306
        %v1308 = vmul.f32 %v1307, %v1257
        %v1309 = vmul.f32 %v1307, %v1258
        %1312 = vrot.lane.b32.xlu0 %v1308, 124
        %v1313 = vpop.permute.xlu0 %1312
        %1314 = vrot.lane.b32.xlu0 %v1309, 124
        %v1315 = vpop.permute.xlu0 %1314
        %v1318 = vadd.f32 %v1304, %v1313
        %v1319 = vadd.f32 %v1305, %v1315
        %s1320 = sld [smem:[#allocation3 + $0x52]]
        %v1321 = vstv %s1320
        %v1322 = vmul.f32 %v1321, %v1257
        %v1323 = vmul.f32 %v1321, %v1258
        %1326 = vrot.lane.b32.xlu0 %v1322, 123
        %v1327 = vpop.permute.xlu0 %1326
        %1328 = vrot.lane.b32.xlu0 %v1323, 123
        %v1329 = vpop.permute.xlu0 %1328
        %v1332 = vadd.f32 %v1318, %v1327
        %v1333 = vadd.f32 %v1319, %v1329
        %s1334 = sld [smem:[#allocation3 + $0x53]]
        %v1335 = vstv %s1334
        %v1336 = vmul.f32 %v1335, %v1257
        %v1337 = vmul.f32 %v1335, %v1258
        %1340 = vrot.lane.b32.xlu0 %v1336, 122
        %v1341 = vpop.permute.xlu0 %1340
        %1342 = vrot.lane.b32.xlu0 %v1337, 122
        %v1343 = vpop.permute.xlu0 %1342
        %v1346 = vadd.f32 %v1332, %v1341
        %v1347 = vadd.f32 %v1333, %v1343
        %s1348 = sld [smem:[#allocation3 + $0x54]]
        %v1349 = vld [vmem:[%s241 + $0x5] sm:$0xff]
        %v1350 = vld [vmem:[%s241 + $0xd] sm:$0xff]
        %v1351 = vstv %s1348
        %v1352 = vmul.f32 %v1351, %v1349
        %v1353 = vmul.f32 %v1351, %v1350
        %v1354 = vadd.f32 %v1346, %v1352
        %v1355 = vadd.f32 %v1347, %v1353
        %s1356 = sld [smem:[#allocation3 + $0x55]]
        %v1357 = vstv %s1356
        %v1358 = vmul.f32 %v1357, %v1349
        %v1359 = vmul.f32 %v1357, %v1350
        %1362 = vrot.lane.b32.xlu0 %v1358, 127
        %v1363 = vpop.permute.xlu0 %1362
        %1364 = vrot.lane.b32.xlu0 %v1359, 127
        %v1365 = vpop.permute.xlu0 %1364
        %v1368 = vadd.f32 %v1354, %v1363
        %v1369 = vadd.f32 %v1355, %v1365
        %s1370 = sld [smem:[#allocation3 + $0x56]]
        %v1371 = vstv %s1370
        %v1372 = vmul.f32 %v1371, %v1349
        %v1373 = vmul.f32 %v1371, %v1350
        %1376 = vrot.lane.b32.xlu0 %v1372, 126
        %v1377 = vpop.permute.xlu0 %1376
        %1378 = vrot.lane.b32.xlu0 %v1373, 126
        %v1379 = vpop.permute.xlu0 %1378
        %v1382 = vadd.f32 %v1368, %v1377
        %v1383 = vadd.f32 %v1369, %v1379
        %s1384 = sld [smem:[#allocation3 + $0x57]]
        %v1385 = vstv %s1384
        %v1386 = vmul.f32 %v1385, %v1349
        %v1387 = vmul.f32 %v1385, %v1350
        %1390 = vrot.lane.b32.xlu0 %v1386, 125
        %v1391 = vpop.permute.xlu0 %1390
        %1392 = vrot.lane.b32.xlu0 %v1387, 125
        %v1393 = vpop.permute.xlu0 %1392
        %v1396 = vadd.f32 %v1382, %v1391
        %v1397 = vadd.f32 %v1383, %v1393
        %s1398 = sld [smem:[#allocation3 + $0x58]]
        %v1399 = vstv %s1398
        %v1400 = vmul.f32 %v1399, %v1349
        %v1401 = vmul.f32 %v1399, %v1350
        %1404 = vrot.lane.b32.xlu0 %v1400, 124
        %v1405 = vpop.permute.xlu0 %1404
        %1406 = vrot.lane.b32.xlu0 %v1401, 124
        %v1407 = vpop.permute.xlu0 %1406
        %v1410 = vadd.f32 %v1396, %v1405
        %v1411 = vadd.f32 %v1397, %v1407
        %s1412 = sld [smem:[#allocation3 + $0x59]]
        %v1413 = vstv %s1412
        %v1414 = vmul.f32 %v1413, %v1349
        %v1415 = vmul.f32 %v1413, %v1350
        %1418 = vrot.lane.b32.xlu0 %v1414, 123
        %v1419 = vpop.permute.xlu0 %1418
        %1420 = vrot.lane.b32.xlu0 %v1415, 123
        %v1421 = vpop.permute.xlu0 %1420
        %v1424 = vadd.f32 %v1410, %v1419
        %v1425 = vadd.f32 %v1411, %v1421
        %s1426 = sld [smem:[#allocation3 + $0x5a]]
        %v1427 = vstv %s1426
        %v1428 = vmul.f32 %v1427, %v1349
        %v1429 = vmul.f32 %v1427, %v1350
        %1432 = vrot.lane.b32.xlu0 %v1428, 122
        %v1433 = vpop.permute.xlu0 %1432
        %1434 = vrot.lane.b32.xlu0 %v1429, 122
        %v1435 = vpop.permute.xlu0 %1434
        %v1438 = vadd.f32 %v1424, %v1433
        %v1439 = vadd.f32 %v1425, %v1435
        %s1440 = sld [smem:[#allocation3 + $0x5b]]
        %v1441 = vld [vmem:[%s241 + $0x6] sm:$0xff]
        %v1442 = vld [vmem:[%s241 + $0xe] sm:$0xff]
        %v1443 = vstv %s1440
        %v1444 = vmul.f32 %v1443, %v1441
        %v1445 = vmul.f32 %v1443, %v1442
        %v1446 = vadd.f32 %v1438, %v1444
        %v1447 = vadd.f32 %v1439, %v1445
        %s1448 = sld [smem:[#allocation3 + $0x5c]]
        %v1449 = vstv %s1448
        %v1450 = vmul.f32 %v1449, %v1441
        %v1451 = vmul.f32 %v1449, %v1442
        %1454 = vrot.lane.b32.xlu0 %v1450, 127
        %v1455 = vpop.permute.xlu0 %1454
        %1456 = vrot.lane.b32.xlu0 %v1451, 127
        %v1457 = vpop.permute.xlu0 %1456
        %v1460 = vadd.f32 %v1446, %v1455
        %v1461 = vadd.f32 %v1447, %v1457
        %s1462 = sld [smem:[#allocation3 + $0x5d]]
        %v1463 = vstv %s1462
        %v1464 = vmul.f32 %v1463, %v1441
        %v1465 = vmul.f32 %v1463, %v1442
        %1468 = vrot.lane.b32.xlu0 %v1464, 126
        %v1469 = vpop.permute.xlu0 %1468
        %1470 = vrot.lane.b32.xlu0 %v1465, 126
        %v1471 = vpop.permute.xlu0 %1470
        %v1474 = vadd.f32 %v1460, %v1469
        %v1475 = vadd.f32 %v1461, %v1471
        %s1476 = sld [smem:[#allocation3 + $0x5e]]
        %v1477 = vstv %s1476
        %v1478 = vmul.f32 %v1477, %v1441
        %v1479 = vmul.f32 %v1477, %v1442
        %1482 = vrot.lane.b32.xlu0 %v1478, 125
        %v1483 = vpop.permute.xlu0 %1482
        %1484 = vrot.lane.b32.xlu0 %v1479, 125
        %v1485 = vpop.permute.xlu0 %1484
        %v1488 = vadd.f32 %v1474, %v1483
        %v1489 = vadd.f32 %v1475, %v1485
        %s1490 = sld [smem:[#allocation3 + $0x5f]]
        %v1491 = vstv %s1490
        %v1492 = vmul.f32 %v1491, %v1441
        %v1493 = vmul.f32 %v1491, %v1442
        %1496 = vrot.lane.b32.xlu0 %v1492, 124
        %v1497 = vpop.permute.xlu0 %1496
        %1498 = vrot.lane.b32.xlu0 %v1493, 124
        %v1499 = vpop.permute.xlu0 %1498
        %v1502 = vadd.f32 %v1488, %v1497
        %v1503 = vadd.f32 %v1489, %v1499
        %s1504 = sld [smem:[#allocation3 + $0x60]]
        %v1505 = vstv %s1504
        %v1506 = vmul.f32 %v1505, %v1441
        %v1507 = vmul.f32 %v1505, %v1442
        %1510 = vrot.lane.b32.xlu0 %v1506, 123
        %v1511 = vpop.permute.xlu0 %1510
        %1512 = vrot.lane.b32.xlu0 %v1507, 123
        %v1513 = vpop.permute.xlu0 %1512
        %v1516 = vadd.f32 %v1502, %v1511
        %v1517 = vadd.f32 %v1503, %v1513
        %s1518 = sld [smem:[#allocation3 + $0x61]]
        %v1519 = vstv %s1518
        %v1520 = vmul.f32 %v1519, %v1441
        %v1521 = vmul.f32 %v1519, %v1442
        %1524 = vrot.lane.b32.xlu0 %v1520, 122
        %v1525 = vpop.permute.xlu0 %1524
        %1526 = vrot.lane.b32.xlu0 %v1521, 122
        %v1527 = vpop.permute.xlu0 %1526
        %v1530 = vadd.f32 %v1516, %v1525
        %v1531 = vadd.f32 %v1517, %v1527
        %v1532 = vsub.f32 0.0, %v1530
        %v1533 = vsub.f32 0.0, %v1531
        %v1534 = vmul.f32 %v1532, 1.442695
        %v1535 = vpow.pop %v1534
        %v1536 = vmul.f32 %v1533, 1.442695
        %v1537 = vpow.pop %v1536
        %v1538 = vadd.f32 %v1535, 1.0
        %v1539 = vadd.f32 %v1537, 1.0
        %v1540 = vrcp.pop %v1538
        %v1541 = vmul.f32 1.0, %v1540
        %v1542 = vrcp.pop %v1539
        %v1543 = vmul.f32 1.0, %v1542
        %1544 = vst.msk [vmem:[%s173] sm:$0xff] %vm182, %v1541
        %1545 = vst.msk [vmem:[%s173 + $0x8] sm:$0xff] %vm182, %v1543
        %s1546 = sand.u32 %s75, 1
        %s1547 = scalar_lea.sflag [#allocation5], %s1546
        %s1548 = sand.u32 %s75, 1
        %s1549 = smul.addr %s1548, 16
        %s1550 = scalar_lea.vmem [#allocation8], %s1549
        // Predicated region
        $region37: #{tpu_custom_call.1} parent=27 // pred_check
          %p1551 = pneg %p85
        $region38: #{tpu_custom_call.1} parent=27 // pred_check_branch
          %1553 = sbr.rel (%p1551) target = $region40
        $region39: #{tpu_custom_call.1} parent=27 // pred_region
          %s1555 = ssub.s32 256, 256
          %1556 = vsyncadd %s1547, %s1555
          %s1557 = smul.addr %s20, 2
          %s1558 = smul.addr %s1557, 128
          %s1559 = scalar_lea.hbm %s2, %s1558
          %s1560 = sshll.u32 %s1550, 4
          %s1561 = int_to_ptr.vmem [resolvable:$true] %s1560
          %1566 = dma.vmem_to_hbm [thread:$0]  %s1561, 256, %s1559, %s1547, 128, 128, 8
        $region40: #{tpu_custom_call.1} parent=27 // pred_fallthru
          _
      $region28: #{tpu_custom_call.1} parent=5 // pred_fallthru
        _
      %p1567 = scmp.le.s32.totalorder 2, %s15
      // Predicated region
      $region41: #{tpu_custom_call.1} parent=5 // pred_check
        %p1568 = pneg %p1567
      $region42: #{tpu_custom_call.1} parent=5 // pred_check_branch
        %1570 = sbr.rel (%p1568) target = $region44
      $region43: #{tpu_custom_call.1} parent=5 // pred_region
        %s1571 = ssub.s32 %s15, 2
        // Predicated region
        $region45: #{tpu_custom_call.1} parent=43 // pred_check
          %p1572 = pneg %p91
        $region46: #{tpu_custom_call.1} parent=43 // pred_check_branch
          %1574 = sbr.rel (%p1572) target = $region48
        $region47: #{tpu_custom_call.1} parent=43 // pred_region
          %s1575 = sand.u32 %s76, 1
          %s1576 = scalar_lea.sflag [#allocation5], %s1575
          %s1577 = sand.u32 %s76, 1
          %s1578 = smul.addr %s1577, 16
          %s1579 = scalar_lea.vmem [#allocation8], %s1578
          %1580 = dma.done %s1576, 256
        $region48: #{tpu_custom_call.1} parent=43 // pred_fallthru
          _
      $region44: #{tpu_custom_call.1} parent=5 // pred_fallthru
        _
    $region6: #{tpu_custom_call.1} parent=1 // loop_footer
      %s19 = sadd.s32 1, %s15
    $region7: #{tpu_custom_call.1} parent=1 // loop_footer_branch
      %14 = sbr.rel target = $region3
    $region8: #{tpu_custom_call.1} parent=1 // loop_exit
      _
    %1581 = vsyncpa [#allocation4], 1
    %s1582 = scalar_lea.sflag [#allocation4], 1
    %1583 = vsyncpa %s1582, 1
    %1584 = vsyncpa [#allocation5], 1
    %s1585 = scalar_lea.sflag [#allocation5], 1
    %1586 = vsyncpa %s1585, 1
    %1587 = vsyncpa [#allocation6], 1
    %s1588 = scalar_lea.sflag [#allocation6], 1
    %1589 = vsyncpa %s1588, 1

</llo_original>
